<compile_context>
chip_gen: v7x
topology: tpu7x:2x2x1
jax: 0.10.0
libtpu: 0.0.40
codegen_flags: <defaults>
</compile_context>

<pallas_src>
import functools

import jax
import jax.numpy as jnp
import numpy as np
from jax.experimental import pallas as pl
from jax.experimental.pallas import tpu as pltpu


def _round_up(a, m):
    return ((a + m - 1) // m) * m


def _dilated_residual_kernel(x_ref, xl_ref, xr_ref, w_dil_ref, b_dil_ref,
                             w_1x1_ref, b_1x1_ref, o_ref, *, dilation,
                             time_tile, halo, seq_len):
    """One (time-tile, batch) grid step.

    x_ref    : (1, Cin, TT)   current time tile of x (unpadded)
    xl_ref   : (1, Cin, HB)   previous HB columns (left halo, clamped at t=0)
    xr_ref   : (1, Cin, HB)   next HB columns (right halo, clamped at t=T)
    w_dil_ref: (3, Cout, Cin) dilated-conv weights, tap-major
    b_dil_ref: (Cout, 1)
    w_1x1_ref: (Cout, Cout)   1x1 conv as a matmul
    b_1x1_ref: (Cout, 1)
    o_ref    : (1, Cout, TT)
    """
    d, TT, HB = dilation, time_tile, halo

    # Global time index of each output column in this tile (2-D iota for TPU).
    t = (pl.program_id(0) * TT
         + jax.lax.broadcasted_iota(jnp.int32, (1, TT), 1))

    xa = x_ref[0]                                   # (Cin, TT) center / residual
    xl = xl_ref[0]                                  # (Cin, HB)
    xr = xr_ref[0]                                  # (Cin, HB)

    # Shifted taps.  The conv's zero padding (and any unspecified data in the
    # ragged last block / clamped halos) is zeroed by the iota masks below, so
    # no wrapper-side jnp.pad is needed.  Masks are applied to the *inputs*
    # (not the products) so garbage never reaches the MXU.
    s0 = jnp.concatenate([xl[:, HB - d:], xa[:, :TT - d]], axis=1)   # x[t - d]
    s0 = jnp.where(t >= d, s0, 0.0)
    s1 = xa                                                          # x[t]
    s2 = jnp.concatenate([xa[:, d:], xr[:, :d]], axis=1)             # x[t + d]
    s2 = jnp.where(t + d < seq_len, s2, 0.0)

    dot = functools.partial(jnp.dot, preferred_element_type=jnp.float32,
                            precision=jax.lax.Precision.HIGHEST)

    # Dilated conv (k=3, padding=d, dilation=d) == 3 shifted MXU matmuls.
    # TODO(synk): for Cin >= ~128 fuse the taps into one K=3*Cin matmul (fewer
    # MXU pushes / MRF pops on v5e/v6e); the split form is better for tiny C.
    acc = (dot(w_dil_ref[0], s0) + dot(w_dil_ref[1], s1)
           + dot(w_dil_ref[2], s2) + b_dil_ref[...])
    h = jnp.maximum(acc, 0.0)                       # ReLU
    out = dot(w_1x1_ref[...], h) + b_1x1_ref[...]   # 1x1 conv

    # TODO(synk): nn.Dropout is identity at inference; training-mode masking
    # would need pltpu.prng_seed / pltpu.prng_random_bits.
    o_ref[0] = (s1 + out).astype(o_ref.dtype)       # residual add, lane-dense store


def dilated_residual_layer(x, w_dil, b_dil, w_1x1, b_1x1, dilation, *,
                           time_tile=4096, vmem_limit_bytes=None):
    """x: (N, C, T) float32 in PyTorch Conv1d layout.

    w_dil : (Cout, Cin, 3)  == nn.Conv1d(in, out, 3, padding=d, dilation=d).weight
    b_dil : (Cout,)
    w_1x1 : (Cout, Cout, 1) == nn.Conv1d(out, out, 1).weight
    b_1x1 : (Cout,)
    """
    N, C, T = x.shape
    Cout = w_1x1.shape[0]
    assert C == Cout, "residual add requires in_channels == out_channels"
    d = int(dilation)

    # Lane-aligned halo width (covers one tap's reach) and time tile (multiple
    # of the halo width so halo block boundaries line up with tile boundaries).
    HB = max(128, _round_up(d, 128))
    TT = _round_up(min(max(time_tile, HB), _round_up(T, HB)), HB)
    nT = -(-T // TT)                       # time tiles (last one may be ragged)
    nHB = -(-T // HB)                      # halo-sized blocks covering T
    bpt = TT // HB                         # halo blocks per time tile

    # Weights as matmul operands (f32 to match PyTorch; cast to bf16 here on
    # v6e/v7x if lower precision is acceptable -> ~2x less HBM traffic).
    w_tap = jnp.transpose(w_dil, (2, 0, 1))          # (3, Cout, Cin)
    b_d = b_dil.reshape(Cout, 1)
    w_11 = w_1x1[:, :, 0]                            # (Cout, Cin)
    b_11 = b_1x1.reshape(Cout, 1)

    if vmem_limit_bytes is None:
        # Double-buffered f32 tiles: main in, out, two halos (weights are tiny).
        per_step = 2 * 4 * (C * TT + Cout * TT + 2 * C * HB)
        vmem_limit_bytes = int(min(48 * 2**20,       # v7x-safe cap (64 MiB / TC)
                                   max(32 * 2**20, 3 * per_step)))

    kernel = functools.partial(_dilated_residual_kernel, dilation=d,
                               time_tile=TT, halo=HB, seq_len=T)

    # TODO(synk): for tiny production C (<= 8), fold several batch rows per grid
    # step so (8,128) sublane tiles are not mostly padding.
    return pl.pallas_call(
        kernel,
        out_shape=jax.ShapeDtypeStruct((N, Cout, T), x.dtype),
        grid=(nT, N),
        in_specs=[
            # Current time tile (ragged last block handled by in-kernel masks).
            pl.BlockSpec((1, C, TT), lambda j, n: (n, 0, j)),
            # Left halo: HB columns just before this tile, clamped at t=0.
            pl.BlockSpec((1, C, HB),
                         lambda j, n: (n, 0, jnp.maximum(j * bpt - 1, 0))),
            # Right halo: HB columns just after this tile, clamped at t=T.
            pl.BlockSpec((1, C, HB),
                         lambda j, n: (n, 0, jnp.minimum((j + 1) * bpt,
                                                         nHB - 1))),
            pl.BlockSpec((3, Cout, C), lambda j, n: (0, 0, 0)),
            pl.BlockSpec((Cout, 1), lambda j, n: (0, 0)),
            pl.BlockSpec((Cout, Cout), lambda j, n: (0, 0)),
            pl.BlockSpec((Cout, 1), lambda j, n: (0, 0)),
        ],
        out_specs=pl.BlockSpec((1, Cout, TT), lambda j, n: (n, 0, j)),
        compiler_params=pltpu.CompilerParams(
            dimension_semantics=("parallel", "parallel"),
            vmem_limit_bytes=vmem_limit_bytes),
    )(x, x, x, w_tap, b_d, w_11, b_11)


def _reference(x, w_dil, b_dil, w_1x1, b_1x1, d):
    """Pure-JAX reference of the PyTorch forward (inference-mode dropout)."""
    N, C, T = x.shape
    hp = jax.lax.Precision.HIGHEST
    xp = jnp.pad(x, ((0, 0), (0, 0), (d, d)))
    s = (jnp.einsum('oi,nit->not', w_dil[:, :, 0], xp[:, :, 0:T], precision=hp)
         + jnp.einsum('oi,nit->not', w_dil[:, :, 1], xp[:, :, d:d + T],
                      precision=hp)
         + jnp.einsum('oi,nit->not', w_dil[:, :, 2], xp[:, :, 2 * d:2 * d + T],
                      precision=hp)
         + b_dil[None, :, None])
    h = jax.nn.relu(s)
    out = (jnp.einsum('oi,nit->not', w_1x1[:, :, 0], h, precision=hp)
           + b_1x1[None, :, None])
    return x + out


if __name__ == "__main__":
    # Module config: dilation=2, in_channels=out_channels=4; input (N=2, C=4, T=16)
    dilation = 2
    N, C, T = 2, 4, 16

    key = jax.random.PRNGKey(0)
    kx, kw1, kb1, kw2, kb2 = jax.random.split(key, 5)

    x = jax.random.normal(kx, (N, C, T), dtype=jnp.float32)
    # Weights in PyTorch Conv1d layout.
    w_dil = jax.random.normal(kw1, (C, C, 3), dtype=jnp.float32) * 0.2
    b_dil = jax.random.normal(kb1, (C,), dtype=jnp.float32) * 0.1
    w_1x1 = jax.random.normal(kw2, (C, C, 1), dtype=jnp.float32) * 0.2
    b_1x1 = jax.random.normal(kb2, (C,), dtype=jnp.float32) * 0.1

    y = dilated_residual_layer(x, w_dil, b_dil, w_1x1, b_1x1, dilation)
    y = jax.block_until_ready(y)

    y_ref = _reference(x, w_dil, b_dil, w_1x1, b_1x1, dilation)
    np.testing.assert_allclose(np.asarray(y), np.asarray(y_ref),
                               rtol=1e-5, atol=1e-5)
    print("KERNEL_OK")
</pallas_src>

<mosaic_0001>
module attributes {stable_mosaic.version = 11 : i64} {
  func.func @_dilated_residual_kernel(%arg0: i32, %arg1: i32, %arg2: memref<1x4x128xf32, #tpu.memory_space<vmem>>, %arg3: memref<1x4x128xf32, #tpu.memory_space<vmem>>, %arg4: memref<1x4x128xf32, #tpu.memory_space<vmem>>, %arg5: memref<3x4x4xf32, #tpu.memory_space<vmem>>, %arg6: memref<4x1xf32, #tpu.memory_space<vmem>>, %arg7: memref<4x4xf32, #tpu.memory_space<vmem>>, %arg8: memref<4x1xf32, #tpu.memory_space<vmem>>, %arg9: memref<1x4x128xf32, #tpu.memory_space<vmem>>) attributes {dimension_semantics = [#tpu.dimension_semantics<parallel>, #tpu.dimension_semantics<parallel>], iteration_bounds = array<i64: 1, 2>, scalar_prefetch = 0 : i64, scratch_operands = 0 : i64, tpu.core_type = #tpu.core_type<tc>, window_params = [{transform_indices = @transform_0, window_bounds = array<i64: 1, 4, 128>}, {transform_indices = @transform_1, window_bounds = array<i64: 1, 4, 128>}, {transform_indices = @transform_2, window_bounds = array<i64: 1, 4, 128>}, {pipeline_mode = #tpu.pipeline_mode<synchronous>, transform_indices = @transform_3, window_bounds = array<i64: 3, 4, 4>}, {pipeline_mode = #tpu.pipeline_mode<synchronous>, transform_indices = @transform_4, window_bounds = array<i64: 4, 1>}, {pipeline_mode = #tpu.pipeline_mode<synchronous>, transform_indices = @transform_5, window_bounds = array<i64: 4, 4>}, {pipeline_mode = #tpu.pipeline_mode<synchronous>, transform_indices = @transform_6, window_bounds = array<i64: 4, 1>}, {transform_indices = @transform_7, window_bounds = array<i64: 1, 4, 128>}]} {
    %c128_i32 = arith.constant 128 : i32
    %0 = arith.muli %arg0, %c128_i32 : i32
    %1 = tpu.iota {dimensions = array<i32: 1>} : vector<1x128xi32>
    %2 = vector.broadcast %0 : i32 to vector<1x128xi32>
    %3 = arith.addi %2, %1 : vector<1x128xi32>
    %c0 = arith.constant 0 : index
    %c0_0 = arith.constant 0 : index
    %c0_1 = arith.constant 0 : index
    %4 = vector.load %arg2[%c0, %c0_0, %c0_1] : memref<1x4x128xf32, #tpu.memory_space<vmem>>, vector<1x4x128xf32>
    %5 = vector.shape_cast %4 : vector<1x4x128xf32> to vector<4x128xf32>
    %c0_2 = arith.constant 0 : index
    %c0_3 = arith.constant 0 : index
    %c0_4 = arith.constant 0 : index
    %6 = vector.load %arg3[%c0_2, %c0_3, %c0_4] : memref<1x4x128xf32, #tpu.memory_space<vmem>>, vector<1x4x128xf32>
    %7 = vector.shape_cast %6 : vector<1x4x128xf32> to vector<4x128xf32>
    %c0_5 = arith.constant 0 : index
    %c0_6 = arith.constant 0 : index
    %c0_7 = arith.constant 0 : index
    %8 = vector.load %arg4[%c0_5, %c0_6, %c0_7] : memref<1x4x128xf32, #tpu.memory_space<vmem>>, vector<1x4x128xf32>
    %9 = vector.shape_cast %8 : vector<1x4x128xf32> to vector<4x128xf32>
    %10 = vector.extract_strided_slice %7 {offsets = [0, 126], sizes = [4, 2], strides = [1, 1]} : vector<4x128xf32> to vector<4x2xf32>
    %11 = vector.extract_strided_slice %5 {offsets = [0, 0], sizes = [4, 126], strides = [1, 1]} : vector<4x128xf32> to vector<4x126xf32>
    %12 = tpu.concatenate %10, %11 in 1 : vector<4x2xf32>, vector<4x126xf32> -> vector<4x128xf32>
    %c2_i32 = arith.constant 2 : i32
    %13 = vector.broadcast %c2_i32 : i32 to vector<1x128xi32>
    %14 = arith.cmpi sge, %3, %13 : vector<1x128xi32>
    %cst = arith.constant 0.000000e+00 : f32
    %15 = vector.shape_cast %14 : vector<1x128xi1> to vector<1x128xi1>
    %16 = vector.broadcast %15 : vector<1x128xi1> to vector<4x128xi1>
    %17 = vector.broadcast %cst : f32 to vector<4x128xf32>
    %18 = arith.select %16, %12, %17 : vector<4x128xi1>, vector<4x128xf32>
    %19 = vector.extract_strided_slice %5 {offsets = [0, 2], sizes = [4, 126], strides = [1, 1]} : vector<4x128xf32> to vector<4x126xf32>
    %20 = vector.extract_strided_slice %9 {offsets = [0, 0], sizes = [4, 2], strides = [1, 1]} : vector<4x128xf32> to vector<4x2xf32>
    %21 = tpu.concatenate %19, %20 in 1 : vector<4x126xf32>, vector<4x2xf32> -> vector<4x128xf32>
    %c2_i32_8 = arith.constant 2 : i32
    %22 = vector.broadcast %c2_i32_8 : i32 to vector<1x128xi32>
    %23 = arith.addi %3, %22 : vector<1x128xi32>
    %c16_i32 = arith.constant 16 : i32
    %24 = vector.broadcast %c16_i32 : i32 to vector<1x128xi32>
    %25 = arith.cmpi slt, %23, %24 : vector<1x128xi32>
    %cst_9 = arith.constant 0.000000e+00 : f32
    %26 = vector.shape_cast %25 : vector<1x128xi1> to vector<1x128xi1>
    %27 = vector.broadcast %26 : vector<1x128xi1> to vector<4x128xi1>
    %28 = vector.broadcast %cst_9 : f32 to vector<4x128xf32>
    %29 = arith.select %27, %21, %28 : vector<4x128xi1>, vector<4x128xf32>
    %c0_10 = arith.constant 0 : index
    %c0_11 = arith.constant 0 : index
    %c0_12 = arith.constant 0 : index
    %30 = vector.load %arg5[%c0_10, %c0_11, %c0_12] : memref<3x4x4xf32, #tpu.memory_space<vmem>>, vector<1x4x4xf32>
    %31 = vector.shape_cast %30 : vector<1x4x4xf32> to vector<4x4xf32>
    %cst_13 = arith.constant dense<0.000000e+00> : vector<4x128xf32>
    %32 = tpu.matmul %31, %18, %cst_13 {dimension_numbers = #tpu.dot_dimension_numbers<[1], [0], [0], [1], [0, 0, 1, 1], [], []>, precision = #tpu.contract_precision<fp32>} : vector<4x4xf32>, vector<4x128xf32>, vector<4x128xf32> -> vector<4x128xf32>
    %c1 = arith.constant 1 : index
    %c0_14 = arith.constant 0 : index
    %c0_15 = arith.constant 0 : index
    %33 = vector.load %arg5[%c1, %c0_14, %c0_15] : memref<3x4x4xf32, #tpu.memory_space<vmem>>, vector<1x4x4xf32>
    %34 = vector.shape_cast %33 : vector<1x4x4xf32> to vector<4x4xf32>
    %cst_16 = arith.constant dense<0.000000e+00> : vector<4x128xf32>
    %35 = tpu.matmul %34, %5, %cst_16 {dimension_numbers = #tpu.dot_dimension_numbers<[1], [0], [0], [1], [0, 0, 1, 1], [], []>, precision = #tpu.contract_precision<fp32>} : vector<4x4xf32>, vector<4x128xf32>, vector<4x128xf32> -> vector<4x128xf32>
    %36 = arith.addf %32, %35 : vector<4x128xf32>
    %c2 = arith.constant 2 : index
    %c0_17 = arith.constant 0 : index
    %c0_18 = arith.constant 0 : index
    %37 = vector.load %arg5[%c2, %c0_17, %c0_18] : memref<3x4x4xf32, #tpu.memory_space<vmem>>, vector<1x4x4xf32>
    %38 = vector.shape_cast %37 : vector<1x4x4xf32> to vector<4x4xf32>
    %cst_19 = arith.constant dense<0.000000e+00> : vector<4x128xf32>
    %39 = tpu.matmul %38, %29, %cst_19 {dimension_numbers = #tpu.dot_dimension_numbers<[1], [0], [0], [1], [0, 0, 1, 1], [], []>, precision = #tpu.contract_precision<fp32>} : vector<4x4xf32>, vector<4x128xf32>, vector<4x128xf32> -> vector<4x128xf32>
    %40 = arith.addf %36, %39 : vector<4x128xf32>
    %c0_20 = arith.constant 0 : index
    %c0_21 = arith.constant 0 : index
    %41 = vector.load %arg6[%c0_20, %c0_21] : memref<4x1xf32, #tpu.memory_space<vmem>>, vector<4x1xf32>
    %42 = vector.broadcast %41 : vector<4x1xf32> to vector<4x128xf32>
    %43 = arith.addf %40, %42 : vector<4x128xf32>
    %cst_22 = arith.constant 0.000000e+00 : f32
    %44 = vector.broadcast %cst_22 : f32 to vector<4x128xf32>
    %45 = arith.maximumf %43, %44 : vector<4x128xf32>
    %c0_23 = arith.constant 0 : index
    %c0_24 = arith.constant 0 : index
    %46 = vector.load %arg7[%c0_23, %c0_24] : memref<4x4xf32, #tpu.memory_space<vmem>>, vector<4x4xf32>
    %cst_25 = arith.constant dense<0.000000e+00> : vector<4x128xf32>
    %47 = tpu.matmul %46, %45, %cst_25 {dimension_numbers = #tpu.dot_dimension_numbers<[1], [0], [0], [1], [0, 0, 1, 1], [], []>, precision = #tpu.contract_precision<fp32>} : vector<4x4xf32>, vector<4x128xf32>, vector<4x128xf32> -> vector<4x128xf32>
    %c0_26 = arith.constant 0 : index
    %c0_27 = arith.constant 0 : index
    %48 = vector.load %arg8[%c0_26, %c0_27] : memref<4x1xf32, #tpu.memory_space<vmem>>, vector<4x1xf32>
    %49 = vector.broadcast %48 : vector<4x1xf32> to vector<4x128xf32>
    %50 = arith.addf %47, %49 : vector<4x128xf32>
    %51 = arith.addf %5, %50 : vector<4x128xf32>
    %c0_28 = arith.constant 0 : index
    %c0_29 = arith.constant 0 : index
    %c0_30 = arith.constant 0 : index
    %52 = vector.load %arg9[%c0_28, %c0_29, %c0_30] : memref<1x4x128xf32, #tpu.memory_space<vmem>>, vector<1x4x128xf32>
    %53 = vector.shape_cast %52 : vector<1x4x128xf32> to vector<4x128xf32>
    %54 = vector.shape_cast %51 : vector<4x128xf32> to vector<1x4x128xf32>
    tpu.vector_store %arg9[%c0_28, %c0_29, %c0_30], %54 {strides = array<i32>} : memref<1x4x128xf32, #tpu.memory_space<vmem>>, vector<1x4x128xf32>,
    return
  }
  func.func @transform_0(%arg0: i32, %arg1: i32) -> (i32, i32, i32) {
    %c0_i32 = arith.constant 0 : i32
    %c0_i32_0 = arith.constant 0 : i32
    return %arg1, %c0_i32, %arg0 : i32, i32, i32
  }
  func.func @transform_1(%arg0: i32, %arg1: i32) -> (i32, i32, i32) {
    %c1_i32 = arith.constant 1 : i32
    %0 = arith.muli %arg0, %c1_i32 : i32
    %c1_i32_0 = arith.constant 1 : i32
    %1 = arith.subi %0, %c1_i32_0 : i32
    %c0_i32 = arith.constant 0 : i32
    %2 = arith.maxsi %1, %c0_i32 : i32
    %c0_i32_1 = arith.constant 0 : i32
    %c0_i32_2 = arith.constant 0 : i32
    return %arg1, %c0_i32_1, %2 : i32, i32, i32
  }
  func.func @transform_2(%arg0: i32, %arg1: i32) -> (i32, i32, i32) {
    %c1_i32 = arith.constant 1 : i32
    %0 = arith.addi %arg0, %c1_i32 : i32
    %c1_i32_0 = arith.constant 1 : i32
    %1 = arith.muli %0, %c1_i32_0 : i32
    %c0_i32 = arith.constant 0 : i32
    %2 = arith.minsi %1, %c0_i32 : i32
    %c0_i32_1 = arith.constant 0 : i32
    %c0_i32_2 = arith.constant 0 : i32
    return %arg1, %c0_i32_1, %2 : i32, i32, i32
  }
  func.func @transform_3(%arg0: i32, %arg1: i32) -> (i32, i32, i32) {
    %c0_i32 = arith.constant 0 : i32
    %c0_i32_0 = arith.constant 0 : i32
    %c0_i32_1 = arith.constant 0 : i32
    %c0_i32_2 = arith.constant 0 : i32
    return %c0_i32, %c0_i32_0, %c0_i32_1 : i32, i32, i32
  }
  func.func @transform_4(%arg0: i32, %arg1: i32) -> (i32, i32) {
    %c0_i32 = arith.constant 0 : i32
    %c0_i32_0 = arith.constant 0 : i32
    %c0_i32_1 = arith.constant 0 : i32
    return %c0_i32, %c0_i32_0 : i32, i32
  }
  func.func @transform_5(%arg0: i32, %arg1: i32) -> (i32, i32) {
    %c0_i32 = arith.constant 0 : i32
    %c0_i32_0 = arith.constant 0 : i32
    %c0_i32_1 = arith.constant 0 : i32
    return %c0_i32, %c0_i32_0 : i32, i32
  }
  func.func @transform_6(%arg0: i32, %arg1: i32) -> (i32, i32) {
    %c0_i32 = arith.constant 0 : i32
    %c0_i32_0 = arith.constant 0 : i32
    %c0_i32_1 = arith.constant 0 : i32
    return %c0_i32, %c0_i32_0 : i32, i32
  }
  func.func @transform_7(%arg0: i32, %arg1: i32) -> (i32, i32, i32) {
    %c0_i32 = arith.constant 0 : i32
    %c0_i32_0 = arith.constant 0 : i32
    return %arg1, %c0_i32, %arg0 : i32, i32, i32
  }
}

</mosaic_0001>

<llo_original>
// kernel: tpu_custom_call.1
$region0: #{tpu_custom_call.1}
  #allocation0 [shape = 'u32[]', space=smem, size = 0x4, offset = 0x4, fixed_abs, tag = 'smem constant byte address 0x4 - core index']
  #allocation1 [shape = 'u32[144,128]{1,0:T(1,128)}', space=vmem, size = 0x12000, scoped, tag = 'internal scratch']
  %s0 = inlined_call_operand.vmem [shape: f32[2,4,16], index: 0, kind: input, shape index: {}]
  %s1 = inlined_call_operand.hbm [shape: f32[2,4,16], index: 1, kind: input, shape index: {}]
  %s2 = inlined_call_operand.hbm [shape: f32[2,4,16], index: 2, kind: input, shape index: {}]
  %s3 = inlined_call_operand.vmem [shape: f32[3,4,4], index: 3, kind: input, shape index: {}]
  %s4 = inlined_call_operand.vmem [shape: f32[4,1], index: 4, kind: input, shape index: {}]
  %s5 = inlined_call_operand.vmem [shape: f32[4,4], index: 5, kind: input, shape index: {}]
  %s6 = inlined_call_operand.vmem [shape: f32[4,1], index: 6, kind: input, shape index: {}]
  %s7 = inlined_call_operand.hbm [shape: f32[2,4,16], index: 7, kind: output, shape index: {}]
  %s8 = sld [smem:[#allocation0]]
  $region69: #{tpu_custom_call.1} parent=0
    _
  %s10 = ssub.s32 1, %s8
  %s11 = scalar_select 0, %s10, %s8
  $region1: #{tpu_custom_call.1} parent=0
    #allocation2 [shape = 'u8[4096]{0}', space=vmem, size = 0x1000, scoped, tag = 'input window, operand 1']
    #allocation3 [shape = 's32[2]{0}', space=sflag, size = 0x8, scoped, tag = 'scoped memory for tpu_custom_call.1']
    #allocation4 [shape = 's32[2]{0}', space=sflag, size = 0x8, scoped, tag = 'scoped memory for tpu_custom_call.1']
    #allocation5 [shape = 'u8[4096]{0}', space=vmem, size = 0x1000, scoped, tag = 'input window, operand 2']
    #allocation6 [shape = 's32[2]{0}', space=sflag, size = 0x8, scoped, tag = 'scoped memory for tpu_custom_call.1']
    #allocation7 [shape = 'u8[4096]{0}', space=vmem, size = 0x1000, scoped, tag = 'output window, operand 0']
    %12 = vsyncpa [#allocation3], 0
    %s13 = scalar_lea.sflag [#allocation3], 1
    %14 = vsyncpa %s13, 0
    %15 = vsyncpa [#allocation6], 0
    %s16 = scalar_lea.sflag [#allocation6], 1
    %17 = vsyncpa %s16, 0
    %18 = vsyncpa [#allocation4], 0
    %s19 = scalar_lea.sflag [#allocation4], 1
    %20 = vsyncpa %s19, 0
    loop: start=0, step=1, limit=4
    $region2: #{tpu_custom_call.1} parent=1 // loop_pre_header
      _
    $region3: #{tpu_custom_call.1} parent=1 // loop_header
      %s22 = sphi 0, %s26
      %p23 = scmp.ge.s32.totalorder %s22, 4
      %s29 = sphi 0, %s41
      %s30 = sphi 0, %s37
      %s31 = sphi 0, %s29
      %s32 = sphi 0, %s30
      %s33 = sphi 0, %s31
      %s34 = sphi 0, %s32
      %s46 = sphi 0, %s48
      %s49 = sphi 0, %s46
      %s50 = sphi 0, %s49
      %s66 = sphi 0, %s50
      %s80 = sphi 0, %s82
      %s83 = sphi 0, %s80
      %s84 = sphi 0, %s83
      %s100 = sphi 0, %s84
      %s114 = sphi 0, %s116
      %s117 = sphi 0, %s114
      %s118 = sphi 0, %s117
      %s134 = sphi 0, %s118
      %s138 = sphi 0, %s138
      %s140 = sphi 0, %s138
      %s141 = sphi 0, %s140
      %s155 = sphi 0, %s141
      %s159 = sphi 0, %s159
      %s161 = sphi 0, %s159
      %s162 = sphi 0, %s161
      %s176 = sphi 0, %s162
      %s180 = sphi 0, %s180
      %s182 = sphi 0, %s180
      %s183 = sphi 0, %s182
      %s197 = sphi 0, %s183
      %s201 = sphi 0, %s201
      %s203 = sphi 0, %s201
      %s204 = sphi 0, %s203
      %s218 = sphi 0, %s204
      %s226 = sphi 0, %s228
      %s229 = sphi 0, %s226
      %s230 = sphi 0, %s229
      %s246 = sphi 0, %s230
    $region4: #{tpu_custom_call.1} parent=1 // loop_header_branch
      %25 = sbr.rel (%p23) target = $region8
    $region5: #{tpu_custom_call.1} parent=1 // loop_body
      %s27 = ssub.s32 %s22, 1
      %s28 = ssub.s32 %s22, 2
      %s35 = sadd.s32 1, %s30
      %p36 = scmp.ge.s32.totalorder %s35, 2
      %s37 = scalar_select %p36, 0, %s35
      %s38 = sadd.s32 1, %s29
      %s39 = scalar_select %p36, %s38, %s29
      %p40 = scmp.ge.s32.totalorder %s39, 1
      %s41 = scalar_select %p40, 0, %s39
      %s42 = ssub.s32 %s30, %s37
      %s43 = ssub.s32 %s29, %s41
      %s44 = sor.u32 %s42, %s43
      %p45 = scmp.eq.s32.totalorder %s44, 0
      %s47 = sadd.s32 %s46, 1
      %s48 = scalar_select %p45, %s46, %s47
      %p51 = pneg %p45
      %p52 = scmp.eq.s32.totalorder %s22, 1
      %p53 = por %p51, %p52
      %p54 = scmp.ne.s32.totalorder %s46, %s49
      %p55 = scmp.eq.s32.totalorder %s22, 0
      %p56 = por %p54, %p55
      %p57 = scmp.ne.s32.totalorder %s46, %s49
      %p58 = scmp.eq.s32.totalorder %s27, 1
      %p59 = por %p57, %p58
      %p60 = scmp.ne.s32.totalorder %s49, %s50
      %p61 = scmp.eq.s32.totalorder %s27, 0
      %p62 = por %p60, %p61
      %p63 = scmp.ne.s32.totalorder %s49, %s50
      %p64 = scmp.eq.s32.totalorder %s28, 1
      %p65 = por %p63, %p64
      %p67 = scmp.ne.s32.totalorder %s50, %s66
      %p68 = scmp.eq.s32.totalorder %s28, 0
      %p69 = por %p67, %p68
      %s70 = ssub.s32 %s29, 1
      %p71 = scmp.gt.s32.totalorder %s70, 0
      %s72 = scalar_select %p71, %s70, 0
      %s73 = ssub.s32 %s41, 1
      %p74 = scmp.gt.s32.totalorder %s73, 0
      %s75 = scalar_select %p74, %s73, 0
      %s76 = ssub.s32 %s30, %s37
      %s77 = ssub.s32 %s72, %s75
      %s78 = sor.u32 %s76, %s77
      %p79 = scmp.eq.s32.totalorder %s78, 0
      %s81 = sadd.s32 %s80, 1
      %s82 = scalar_select %p79, %s80, %s81
      %p85 = pneg %p79
      %p86 = scmp.eq.s32.totalorder %s22, 1
      %p87 = por %p85, %p86
      %p88 = scmp.ne.s32.totalorder %s80, %s83
      %p89 = scmp.eq.s32.totalorder %s22, 0
      %p90 = por %p88, %p89
      %p91 = scmp.ne.s32.totalorder %s80, %s83
      %p92 = scmp.eq.s32.totalorder %s27, 1
      %p93 = por %p91, %p92
      %p94 = scmp.ne.s32.totalorder %s83, %s84
      %p95 = scmp.eq.s32.totalorder %s27, 0
      %p96 = por %p94, %p95
      %p97 = scmp.ne.s32.totalorder %s83, %s84
      %p98 = scmp.eq.s32.totalorder %s28, 1
      %p99 = por %p97, %p98
      %p101 = scmp.ne.s32.totalorder %s84, %s100
      %p102 = scmp.eq.s32.totalorder %s28, 0
      %p103 = por %p101, %p102
      %s104 = sadd.s32 %s29, 1
      %p105 = scmp.lt.s32.totalorder %s104, 0
      %s106 = scalar_select %p105, %s104, 0
      %s107 = sadd.s32 %s41, 1
      %p108 = scmp.lt.s32.totalorder %s107, 0
      %s109 = scalar_select %p108, %s107, 0
      %s110 = ssub.s32 %s30, %s37
      %s111 = ssub.s32 %s106, %s109
      %s112 = sor.u32 %s110, %s111
      %p113 = scmp.eq.s32.totalorder %s112, 0
      %s115 = sadd.s32 %s114, 1
      %s116 = scalar_select %p113, %s114, %s115
      %p119 = pneg %p113
      %p120 = scmp.eq.s32.totalorder %s22, 1
      %p121 = por %p119, %p120
      %p122 = scmp.ne.s32.totalorder %s114, %s117
      %p123 = scmp.eq.s32.totalorder %s22, 0
      %p124 = por %p122, %p123
      %p125 = scmp.ne.s32.totalorder %s114, %s117
      %p126 = scmp.eq.s32.totalorder %s27, 1
      %p127 = por %p125, %p126
      %p128 = scmp.ne.s32.totalorder %s117, %s118
      %p129 = scmp.eq.s32.totalorder %s27, 0
      %p130 = por %p128, %p129
      %p131 = scmp.ne.s32.totalorder %s117, %s118
      %p132 = scmp.eq.s32.totalorder %s28, 1
      %p133 = por %p131, %p132
      %p135 = scmp.ne.s32.totalorder %s118, %s134
      %p136 = scmp.eq.s32.totalorder %s28, 0
      %p137 = por %p135, %p136
      %s139 = sadd.s32 %s138, 1
      %p142 = scmp.eq.s32.totalorder %s22, 1
      %p143 = scmp.ne.s32.totalorder %s138, %s140
      %p144 = scmp.eq.s32.totalorder %s22, 0
      %p145 = por %p143, %p144
      %p146 = scmp.ne.s32.totalorder %s138, %s140
      %p147 = scmp.eq.s32.totalorder %s27, 1
      %p148 = por %p146, %p147
      %p149 = scmp.ne.s32.totalorder %s140, %s141
      %p150 = scmp.eq.s32.totalorder %s27, 0
      %p151 = por %p149, %p150
      %p152 = scmp.ne.s32.totalorder %s140, %s141
      %p153 = scmp.eq.s32.totalorder %s28, 1
      %p154 = por %p152, %p153
      %p156 = scmp.ne.s32.totalorder %s141, %s155
      %p157 = scmp.eq.s32.totalorder %s28, 0
      %p158 = por %p156, %p157
      %s160 = sadd.s32 %s159, 1
      %p163 = scmp.eq.s32.totalorder %s22, 1
      %p164 = scmp.ne.s32.totalorder %s159, %s161
      %p165 = scmp.eq.s32.totalorder %s22, 0
      %p166 = por %p164, %p165
      %p167 = scmp.ne.s32.totalorder %s159, %s161
      %p168 = scmp.eq.s32.totalorder %s27, 1
      %p169 = por %p167, %p168
      %p170 = scmp.ne.s32.totalorder %s161, %s162
      %p171 = scmp.eq.s32.totalorder %s27, 0
      %p172 = por %p170, %p171
      %p173 = scmp.ne.s32.totalorder %s161, %s162
      %p174 = scmp.eq.s32.totalorder %s28, 1
      %p175 = por %p173, %p174
      %p177 = scmp.ne.s32.totalorder %s162, %s176
      %p178 = scmp.eq.s32.totalorder %s28, 0
      %p179 = por %p177, %p178
      %s181 = sadd.s32 %s180, 1
      %p184 = scmp.eq.s32.totalorder %s22, 1
      %p185 = scmp.ne.s32.totalorder %s180, %s182
      %p186 = scmp.eq.s32.totalorder %s22, 0
      %p187 = por %p185, %p186
      %p188 = scmp.ne.s32.totalorder %s180, %s182
      %p189 = scmp.eq.s32.totalorder %s27, 1
      %p190 = por %p188, %p189
      %p191 = scmp.ne.s32.totalorder %s182, %s183
      %p192 = scmp.eq.s32.totalorder %s27, 0
      %p193 = por %p191, %p192
      %p194 = scmp.ne.s32.totalorder %s182, %s183
      %p195 = scmp.eq.s32.totalorder %s28, 1
      %p196 = por %p194, %p195
      %p198 = scmp.ne.s32.totalorder %s183, %s197
      %p199 = scmp.eq.s32.totalorder %s28, 0
      %p200 = por %p198, %p199
      %s202 = sadd.s32 %s201, 1
      %p205 = scmp.eq.s32.totalorder %s22, 1
      %p206 = scmp.ne.s32.totalorder %s201, %s203
      %p207 = scmp.eq.s32.totalorder %s22, 0
      %p208 = por %p206, %p207
      %p209 = scmp.ne.s32.totalorder %s201, %s203
      %p210 = scmp.eq.s32.totalorder %s27, 1
      %p211 = por %p209, %p210
      %p212 = scmp.ne.s32.totalorder %s203, %s204
      %p213 = scmp.eq.s32.totalorder %s27, 0
      %p214 = por %p212, %p213
      %p215 = scmp.ne.s32.totalorder %s203, %s204
      %p216 = scmp.eq.s32.totalorder %s28, 1
      %p217 = por %p215, %p216
      %p219 = scmp.ne.s32.totalorder %s204, %s218
      %p220 = scmp.eq.s32.totalorder %s28, 0
      %p221 = por %p219, %p220
      %s222 = ssub.s32 %s30, %s37
      %s223 = ssub.s32 %s29, %s41
      %s224 = sor.u32 %s222, %s223
      %p225 = scmp.eq.s32.totalorder %s224, 0
      %s227 = sadd.s32 %s226, 1
      %s228 = scalar_select %p225, %s226, %s227
      %p231 = pneg %p225
      %p232 = scmp.eq.s32.totalorder %s22, 1
      %p233 = por %p231, %p232
      %p234 = scmp.ne.s32.totalorder %s226, %s229
      %p235 = scmp.eq.s32.totalorder %s22, 0
      %p236 = por %p234, %p235
      %p237 = scmp.ne.s32.totalorder %s226, %s229
      %p238 = scmp.eq.s32.totalorder %s27, 1
      %p239 = por %p237, %p238
      %p240 = scmp.ne.s32.totalorder %s229, %s230
      %p241 = scmp.eq.s32.totalorder %s27, 0
      %p242 = por %p240, %p241
      %p243 = scmp.ne.s32.totalorder %s229, %s230
      %p244 = scmp.eq.s32.totalorder %s28, 1
      %p245 = por %p243, %p244
      %p247 = scmp.ne.s32.totalorder %s230, %s246
      %p248 = scmp.eq.s32.totalorder %s28, 0
      %p249 = por %p247, %p248
      %p250 = scmp.le.s32.totalorder 1, %s22
      %p251 = scmp.lt.s32.totalorder %s22, 3
      %p252 = pnand %p250, %p251
      %p253 = pneg %p252
      // Predicated region
      $region9: #{tpu_custom_call.1} parent=5 // pred_check
        _
      $region10: #{tpu_custom_call.1} parent=5 // pred_check_branch
        %255 = sbr.rel (%p252) target = $region12
      $region11: #{tpu_custom_call.1} parent=5 // pred_region
        %s256 = ssub.s32 %s22, 1
        // Predicated region
        $region13: #{tpu_custom_call.1} parent=11 // pred_check
          %p257 = pneg %p151
        $region14: #{tpu_custom_call.1} parent=11 // pred_check_branch
          %259 = sbr.rel (%p257) target = $region16
        $region15: #{tpu_custom_call.1} parent=11 // pred_region
          _
        $region16: #{tpu_custom_call.1} parent=11 // pred_fallthru
          _
        // Predicated region
        $region17: #{tpu_custom_call.1} parent=11 // pred_check
          %p260 = pneg %p172
        $region18: #{tpu_custom_call.1} parent=11 // pred_check_branch
          %262 = sbr.rel (%p260) target = $region20
        $region19: #{tpu_custom_call.1} parent=11 // pred_region
          _
        $region20: #{tpu_custom_call.1} parent=11 // pred_fallthru
          _
        // Predicated region
        $region21: #{tpu_custom_call.1} parent=11 // pred_check
          %p263 = pneg %p193
        $region22: #{tpu_custom_call.1} parent=11 // pred_check_branch
          %265 = sbr.rel (%p263) target = $region24
        $region23: #{tpu_custom_call.1} parent=11 // pred_region
          _
        $region24: #{tpu_custom_call.1} parent=11 // pred_fallthru
          _
        // Predicated region
        $region25: #{tpu_custom_call.1} parent=11 // pred_check
          %p266 = pneg %p214
        $region26: #{tpu_custom_call.1} parent=11 // pred_check_branch
          %268 = sbr.rel (%p266) target = $region28
        $region27: #{tpu_custom_call.1} parent=11 // pred_region
          _
        $region28: #{tpu_custom_call.1} parent=11 // pred_fallthru
          _
      $region12: #{tpu_custom_call.1} parent=5 // pred_fallthru
        _
      %p269 = scmp.lt.s32.totalorder %s22, 2
      // Predicated region
      $region29: #{tpu_custom_call.1} parent=5 // pred_check
        %p270 = pneg %p269
      $region30: #{tpu_custom_call.1} parent=5 // pred_check_branch
        %272 = sbr.rel (%p270) target = $region32
      $region31: #{tpu_custom_call.1} parent=5 // pred_region
        // Predicated region
        $region33: #{tpu_custom_call.1} parent=31 // pred_check
          %p273 = pneg %p56
        $region34: #{tpu_custom_call.1} parent=31 // pred_check_branch
          %275 = sbr.rel (%p273) target = $region36
        $region35: #{tpu_custom_call.1} parent=31 // pred_region
          %p276 = scmp.lt.s32.totalorder %s30, 1
          %s277 = scalar_select %p276, %s30, 1
          %p278 = scmp.lt.s32.totalorder %s29, 0
          %s279 = scalar_select %p278, %s29, 0
          %s280 = sadd.s32 %s279, %s277
          %s281 = smul.addr %s280, 4
          %s282 = scalar_lea.vmem %s0, %s281
        $region36: #{tpu_custom_call.1} parent=31 // pred_fallthru
          _
        // Predicated region
        $region37: #{tpu_custom_call.1} parent=31 // pred_check
          %p283 = pneg %p90
        $region38: #{tpu_custom_call.1} parent=31 // pred_check_branch
          %285 = sbr.rel (%p283) target = $region40
        $region39: #{tpu_custom_call.1} parent=31 // pred_region
          %s286 = sand.u32 %s80, 1
          %s287 = scalar_lea.sflag [#allocation3], %s286
          %s288 = sand.u32 %s80, 1
          %s289 = smul.addr %s288, 4
          %s290 = scalar_lea.vmem [#allocation2], %s289
          %s291 = ssub.s32 %s29, 1
          %p292 = scmp.gt.s32.totalorder %s291, 0
          %s293 = scalar_select %p292, %s291, 0
          %s295 = ssub.s32 64, 64
          %296 = vsyncadd %s287, %s295
          %s297 = sadd.s32 %s293, %s30
          %s298 = smul.addr %s297, 64
          %s299 = scalar_lea.hbm %s1, %s298
          %s301 = sshll.u32 %s290, 4
          %s302 = int_to_ptr.vmem [resolvable:$true] %s301
          %304 = dma.hbm_to_vmem [thread:$0]  %s299, 64, %s302, %s287
        $region40: #{tpu_custom_call.1} parent=31 // pred_fallthru
          _
        // Predicated region
        $region41: #{tpu_custom_call.1} parent=31 // pred_check
          %p305 = pneg %p124
        $region42: #{tpu_custom_call.1} parent=31 // pred_check_branch
          %307 = sbr.rel (%p305) target = $region44
        $region43: #{tpu_custom_call.1} parent=31 // pred_region
          %s308 = sand.u32 %s114, 1
          %s309 = scalar_lea.sflag [#allocation6], %s308
          %s310 = sand.u32 %s114, 1
          %s311 = smul.addr %s310, 4
          %s312 = scalar_lea.vmem [#allocation5], %s311
          %s313 = sadd.s32 %s29, 1
          %p314 = scmp.lt.s32.totalorder %s313, 0
          %s315 = scalar_select %p314, %s313, 0
          %s317 = ssub.s32 64, 64
          %318 = vsyncadd %s309, %s317
          %s319 = sadd.s32 %s315, %s30
          %s320 = smul.addr %s319, 64
          %s321 = scalar_lea.hbm %s2, %s320
          %s323 = sshll.u32 %s312, 4
          %s324 = int_to_ptr.vmem [resolvable:$true] %s323
          %326 = dma.hbm_to_vmem [thread:$0]  %s321, 64, %s324, %s309
        $region44: #{tpu_custom_call.1} parent=31 // pred_fallthru
          _
      $region32: #{tpu_custom_call.1} parent=5 // pred_fallthru
        _
      %p327 = scmp.le.s32.totalorder 1, %s22
      %p328 = scmp.lt.s32.totalorder %s22, 3
      %p329 = pnand %p327, %p328
      %p330 = pneg %p329
      // Predicated region
      $region45: #{tpu_custom_call.1} parent=5 // pred_check
        _
      $region46: #{tpu_custom_call.1} parent=5 // pred_check_branch
        %332 = sbr.rel (%p329) target = $region48
      $region47: #{tpu_custom_call.1} parent=5 // pred_region
        %s333 = ssub.s32 %s22, 1
        %s334 = sand.u32 %s83, 1
        %s335 = scalar_lea.sflag [#allocation3], %s334
        %s336 = sand.u32 %s83, 1
        %s337 = smul.addr %s336, 4
        %s338 = scalar_lea.vmem [#allocation2], %s337
        // Predicated region
        $region49: #{tpu_custom_call.1} parent=47 // pred_check
          %p339 = pneg %p96
        $region50: #{tpu_custom_call.1} parent=47 // pred_check_branch
          %341 = sbr.rel (%p339) target = $region52
        $region51: #{tpu_custom_call.1} parent=47 // pred_region
          %342 = dma.done %s335, 64
        $region52: #{tpu_custom_call.1} parent=47 // pred_fallthru
          _
        %s343 = sand.u32 %s117, 1
        %s344 = scalar_lea.sflag [#allocation6], %s343
        %s345 = sand.u32 %s117, 1
        %s346 = smul.addr %s345, 4
        %s347 = scalar_lea.vmem [#allocation5], %s346
        // Predicated region
        $region53: #{tpu_custom_call.1} parent=47 // pred_check
          %p348 = pneg %p130
        $region54: #{tpu_custom_call.1} parent=47 // pred_check_branch
          %350 = sbr.rel (%p348) target = $region56
        $region55: #{tpu_custom_call.1} parent=47 // pred_region
          %351 = dma.done %s344, 64
        $region56: #{tpu_custom_call.1} parent=47 // pred_fallthru
          _
        %p352 = scmp.lt.s32.totalorder %s32, 1
        %s353 = scalar_select %p352, %s32, 1
        %p354 = scmp.lt.s32.totalorder %s31, 0
        %s355 = scalar_select %p354, %s31, 0
        %s356 = sadd.s32 %s355, %s353
        %s357 = smul.addr %s356, 4
        %s358 = scalar_lea.vmem %s0, %s357
        %p359 = pneg %p62
        %p360 = pneg %p59
        %s361 = sand.u32 %s83, 1
        %s362 = scalar_lea.sflag [#allocation3], %s361
        %s363 = sand.u32 %s83, 1
        %s364 = smul.addr %s363, 4
        %s365 = scalar_lea.vmem [#allocation2], %s364
        %p366 = pneg %p96
        %p367 = pneg %p93
        %s368 = sand.u32 %s117, 1
        %s369 = scalar_lea.sflag [#allocation6], %s368
        %s370 = sand.u32 %s117, 1
        %s371 = smul.addr %s370, 4
        %s372 = scalar_lea.vmem [#allocation5], %s371
        %p373 = pneg %p130
        %p374 = pneg %p127
        %p375 = pneg %p151
        %p376 = pneg %p148
        %p377 = pneg %p172
        %p378 = pneg %p169
        %p379 = pneg %p193
        %p380 = pneg %p190
        %p381 = pneg %p214
        %p382 = pneg %p211
        %p383 = pneg %p242
        %p384 = pneg %p239
        %s385 = sand.u32 %s229, 1
        %s386 = scalar_lea.sflag [#allocation4], %s385
        %s387 = sand.u32 %s229, 1
        %s388 = smul.addr %s387, 4
        %s389 = scalar_lea.vmem [#allocation7], %s388
        %p390 = scmp.lt.s32.totalorder %s32, 1
        %s391 = scalar_select %p390, %s32, 1
        %p392 = scmp.lt.s32.totalorder %s31, 0
        %s393 = scalar_select %p392, %s31, 0
        %s394 = sadd.s32 %s393, %s391
        %s395 = smul.addr %s394, 4
        %s396 = scalar_lea.vmem %s0, %s395
        %s397 = ssub.s32 %s31, 1
        %p398 = scmp.gt.s32.totalorder %s397, 0
        %s399 = scalar_select %p398, %s397, 0
        %s400 = sadd.s32 %s31, 1
        %p401 = scmp.lt.s32.totalorder %s400, 0
        %s402 = scalar_select %p401, %s400, 0
        %s403 = smul.u32 %s31, 128
        %v404 = vlaneseq
        %v405 = vand.u32 %v404, 127
        %v406 = vstv %s403
        %v407 = vadd.s32 %v406, %v405
        %v408 = vld [vmem:[%s396] sm:$0xf]
        %v409 = vld [vmem:[%s338] sm:$0xf]
        %v410 = vld [vmem:[%s347] sm:$0xf]
        %412 = vrot.lane.b32.xlu0 %v409, 2
        %v413 = vpop.permute.xlu0 %412
        %416 = vrot.lane.b32.xlu0 %v408, 2
        %v417 = vpop.permute.xlu0 %416
        %vm419 = vcmask 15360
        %v420 = vsel %vm419, %v413, %v417
        %vm421 = vcmp.ge.s32.totalorder %v407, 2
        %v422 = vsel %vm421, 1, 0
        %vm423 = vcmp.eq.s32.totalorder %v422, 1
        %v424 = vsel %vm423, %v420, 0.0
        %425 = vrot.lane.b32.xlu0 %v408, 126
        %v426 = vpop.permute.xlu0 %425
        %429 = vrot.lane.b32.xlu0 %v410, 126
        %v430 = vpop.permute.xlu0 %429
        %vm432 = vcmask 1031168
        %v433 = vsel %vm432, %v426, %v430
        %v434 = vadd.s32 %v407, 2
        %vm435 = vcmp.lt.s32.totalorder %v434, 16
        %v436 = vsel %vm435, 1, 0
        %vm437 = vcmp.eq.s32.totalorder %v436, 1
        %v438 = vsel %vm437, %v433, 0.0
        %v439 = vld [vmem:[%s3] sm:$0xf]
        %s440 = scalar_lea.vmem %s3, 4
        %v441 = vld [vmem:[%s440] sm:$0xf]
        %vm442 = vcmask 31744
        %v444 = vsel %vm442, %v441, 0
        %vm446 = vcmask 1043456
        %v447 = vsel %vm446, %v408, 0
        %449 = vmatprep.subr.mxu0 0.0
        %v450 = vand.u32 %v447, 4294901760
        %451 = vmatpush1.msra.mxu0 %v450
        %452 = vmatprep.subr.mxu0 0.0
        %453 = vmatpush1.msra.mxu0 0.0
        %454 = vmatprep.subr.mxu0 0.0
        %455 = vmatpush1.msra.mxu0 0.0
        %456 = vmatprep.subr.mxu0 0.0
        %457 = vmatpush1.msra.mxu0 0.0
        %458 = vmatprep.subr.mxu0 0.0
        %459 = vmatpush1.msra.mxu0 0.0
        %460 = vmatprep.subr.mxu0 0.0
        %461 = vmatpush1.msra.mxu0 0.0
        %462 = vmatprep.subr.mxu0 0.0
        %463 = vmatpush1.msra.mxu0 0.0
        %464 = vmatprep.subr.mxu0 0.0
        %465 = vmatpush1.msra.mxu0 0.0
        %466 = vmatprep.subr.mxu0 0.0
        %467 = vmatpush1.msra.mxu0 0.0
        %468 = vmatprep.subr.mxu0 0.0
        %469 = vmatpush1.msra.mxu0 0.0
        %470 = vmatprep.subr.mxu0 0.0
        %471 = vmatpush1.msra.mxu0 0.0
        %472 = vmatprep.subr.mxu0 0.0
        %473 = vmatpush1.msra.mxu0 0.0
        %474 = vmatprep.subr.mxu0 0.0
        %475 = vmatpush1.msra.mxu0 0.0
        %476 = vmatprep.subr.mxu0 0.0
        %477 = vmatpush1.msra.mxu0 0.0
        %478 = vmatprep.subr.mxu0 0.0
        %479 = vmatpush1.msra.mxu0 0.0
        %480 = vmatprep.subr.mxu0 0.0
        %481 = vmatpush1.msra.mxu0 0.0
        %482 = vmatprep.subr.mxu0 0.0
        %483 = vmatpush1.msra.mxu0 0.0
        %484 = vmatprep.subr.mxu0 0.0
        %485 = vmatpush1.msra.mxu0 0.0
        %486 = vmatprep.subr.mxu0 0.0
        %487 = vmatpush1.msra.mxu0 0.0
        %488 = vmatprep.subr.mxu0 0.0
        %489 = vmatpush1.msra.mxu0 0.0
        %490 = vmatprep.subr.mxu0 0.0
        %491 = vmatpush1.msra.mxu0 0.0
        %492 = vmatprep.subr.mxu0 0.0
        %493 = vmatpush1.msra.mxu0 0.0
        %494 = vmatprep.subr.mxu0 0.0
        %495 = vmatpush1.msra.mxu0 0.0
        %496 = vmatprep.subr.mxu0 0.0
        %497 = vmatpush1.msra.mxu0 0.0
        %498 = vmatprep.subr.mxu0 0.0
        %499 = vmatpush1.msra.mxu0 0.0
        %500 = vmatprep.subr.mxu0 0.0
        %501 = vmatpush1.msra.mxu0 0.0
        %502 = vmatprep.subr.mxu0 0.0
        %503 = vmatpush1.msra.mxu0 0.0
        %504 = vmatprep.subr.mxu0 0.0
        %505 = vmatpush1.msra.mxu0 0.0
        %506 = vmatprep.subr.mxu0 0.0
        %507 = vmatpush1.msra.mxu0 0.0
        %508 = vmatprep.subr.mxu0 0.0
        %509 = vmatpush1.msra.mxu0 0.0
        %510 = vmatprep.subr.mxu0 0.0
        %511 = vmatpush1.msra.mxu0 0.0
        %512 = vmatprep.subr.mxu0 0.0
        %513 = vmatpush1.msra.mxu0 0.0
        %514 = vmatprep.mubr.f32.mxu0 0.0
        %v515 = vand.u32 %v444, 4294901760
        %v516 = vsub.f32 %v444, %v515
        %v517 = vand.u32 %v516, 4294901760
        %v518 = vsub.f32 %v516, %v517
        %v519 = vand.u32 %v518, 4294901760
        %520 = vmatmul.mubr.f32.gmra.mrb[0].mxu0 %v519
        %v521 = vpop.f32.mrb[0].mxu0
        %v522 = vadd.f32 0.0, %v521
        %v523 = vpop.f32.mrb[0].mxu0
        %524 = vdwg.mxu0
        %525 = vmatprep.subr.mxu0 0.0
        %v526 = vand.u32 %v447, 4294901760
        %v527 = vsub.f32 %v447, %v526
        %v528 = vand.u32 %v527, 4294901760
        %v529 = vsub.f32 %v527, %v528
        %v530 = vand.u32 %v529, 4294901760
        %531 = vmatpush1.msra.mxu0 %v530
        %532 = vmatprep.subr.mxu0 0.0
        %533 = vmatpush1.msra.mxu0 0.0
        %534 = vmatprep.subr.mxu0 0.0
        %535 = vmatpush1.msra.mxu0 0.0
        %536 = vmatprep.subr.mxu0 0.0
        %537 = vmatpush1.msra.mxu0 0.0
        %538 = vmatprep.subr.mxu0 0.0
        %539 = vmatpush1.msra.mxu0 0.0
        %540 = vmatprep.subr.mxu0 0.0
        %541 = vmatpush1.msra.mxu0 0.0
        %542 = vmatprep.subr.mxu0 0.0
        %543 = vmatpush1.msra.mxu0 0.0
        %544 = vmatprep.subr.mxu0 0.0
        %545 = vmatpush1.msra.mxu0 0.0
        %546 = vmatprep.subr.mxu0 0.0
        %547 = vmatpush1.msra.mxu0 0.0
        %548 = vmatprep.subr.mxu0 0.0
        %549 = vmatpush1.msra.mxu0 0.0
        %550 = vmatprep.subr.mxu0 0.0
        %551 = vmatpush1.msra.mxu0 0.0
        %552 = vmatprep.subr.mxu0 0.0
        %553 = vmatpush1.msra.mxu0 0.0
        %554 = vmatprep.subr.mxu0 0.0
        %555 = vmatpush1.msra.mxu0 0.0
        %556 = vmatprep.subr.mxu0 0.0
        %557 = vmatpush1.msra.mxu0 0.0
        %558 = vmatprep.subr.mxu0 0.0
        %559 = vmatpush1.msra.mxu0 0.0
        %560 = vmatprep.subr.mxu0 0.0
        %561 = vmatpush1.msra.mxu0 0.0
        %562 = vmatprep.subr.mxu0 0.0
        %563 = vmatpush1.msra.mxu0 0.0
        %564 = vmatprep.subr.mxu0 0.0
        %565 = vmatpush1.msra.mxu0 0.0
        %566 = vmatprep.subr.mxu0 0.0
        %567 = vmatpush1.msra.mxu0 0.0
        %568 = vmatprep.subr.mxu0 0.0
        %569 = vmatpush1.msra.mxu0 0.0
        %570 = vmatprep.subr.mxu0 0.0
        %571 = vmatpush1.msra.mxu0 0.0
        %572 = vmatprep.subr.mxu0 0.0
        %573 = vmatpush1.msra.mxu0 0.0
        %574 = vmatprep.subr.mxu0 0.0
        %575 = vmatpush1.msra.mxu0 0.0
        %576 = vmatprep.subr.mxu0 0.0
        %577 = vmatpush1.msra.mxu0 0.0
        %578 = vmatprep.subr.mxu0 0.0
        %579 = vmatpush1.msra.mxu0 0.0
        %580 = vmatprep.subr.mxu0 0.0
        %581 = vmatpush1.msra.mxu0 0.0
        %582 = vmatprep.subr.mxu0 0.0
        %583 = vmatpush1.msra.mxu0 0.0
        %584 = vmatprep.subr.mxu0 0.0
        %585 = vmatpush1.msra.mxu0 0.0
        %586 = vmatprep.subr.mxu0 0.0
        %587 = vmatpush1.msra.mxu0 0.0
        %588 = vmatprep.subr.mxu0 0.0
        %589 = vmatpush1.msra.mxu0 0.0
        %590 = vmatprep.subr.mxu0 0.0
        %591 = vmatpush1.msra.mxu0 0.0
        %592 = vmatprep.subr.mxu0 0.0
        %593 = vmatpush1.msra.mxu0 0.0
        %594 = vmatprep.mubr.f32.mxu0 0.0
        %v595 = vand.u32 %v444, 4294901760
        %596 = vmatmul.mubr.f32.gmra.mrb[0].mxu0 %v595
        %v597 = vpop.f32.mrb[0].mxu0
        %v598 = vadd.f32 %v522, %v597
        %v599 = vpop.f32.mrb[0].mxu0
        %600 = vdwg.mxu0
        %601 = vmatprep.subr.mxu0 0.0
        %v602 = vand.u32 %v447, 4294901760
        %v603 = vsub.f32 %v447, %v602
        %604 = vmatpush1.msra.mxu0 %v603
        %605 = vmatprep.subr.mxu0 0.0
        %606 = vmatpush1.msra.mxu0 0.0
        %607 = vmatprep.subr.mxu0 0.0
        %608 = vmatpush1.msra.mxu0 0.0
        %609 = vmatprep.subr.mxu0 0.0
        %610 = vmatpush1.msra.mxu0 0.0
        %611 = vmatprep.subr.mxu0 0.0
        %612 = vmatpush1.msra.mxu0 0.0
        %613 = vmatprep.subr.mxu0 0.0
        %614 = vmatpush1.msra.mxu0 0.0
        %615 = vmatprep.subr.mxu0 0.0
        %616 = vmatpush1.msra.mxu0 0.0
        %617 = vmatprep.subr.mxu0 0.0
        %618 = vmatpush1.msra.mxu0 0.0
        %619 = vmatprep.subr.mxu0 0.0
        %620 = vmatpush1.msra.mxu0 0.0
        %621 = vmatprep.subr.mxu0 0.0
        %622 = vmatpush1.msra.mxu0 0.0
        %623 = vmatprep.subr.mxu0 0.0
        %624 = vmatpush1.msra.mxu0 0.0
        %625 = vmatprep.subr.mxu0 0.0
        %626 = vmatpush1.msra.mxu0 0.0
        %627 = vmatprep.subr.mxu0 0.0
        %628 = vmatpush1.msra.mxu0 0.0
        %629 = vmatprep.subr.mxu0 0.0
        %630 = vmatpush1.msra.mxu0 0.0
        %631 = vmatprep.subr.mxu0 0.0
        %632 = vmatpush1.msra.mxu0 0.0
        %633 = vmatprep.subr.mxu0 0.0
        %634 = vmatpush1.msra.mxu0 0.0
        %635 = vmatprep.subr.mxu0 0.0
        %636 = vmatpush1.msra.mxu0 0.0
        %637 = vmatprep.subr.mxu0 0.0
        %638 = vmatpush1.msra.mxu0 0.0
        %639 = vmatprep.subr.mxu0 0.0
        %640 = vmatpush1.msra.mxu0 0.0
        %641 = vmatprep.subr.mxu0 0.0
        %642 = vmatpush1.msra.mxu0 0.0
        %643 = vmatprep.subr.mxu0 0.0
        %644 = vmatpush1.msra.mxu0 0.0
        %645 = vmatprep.subr.mxu0 0.0
        %646 = vmatpush1.msra.mxu0 0.0
        %647 = vmatprep.subr.mxu0 0.0
        %648 = vmatpush1.msra.mxu0 0.0
        %649 = vmatprep.subr.mxu0 0.0
        %650 = vmatpush1.msra.mxu0 0.0
        %651 = vmatprep.subr.mxu0 0.0
        %652 = vmatpush1.msra.mxu0 0.0
        %653 = vmatprep.subr.mxu0 0.0
        %654 = vmatpush1.msra.mxu0 0.0
        %655 = vmatprep.subr.mxu0 0.0
        %656 = vmatpush1.msra.mxu0 0.0
        %657 = vmatprep.subr.mxu0 0.0
        %658 = vmatpush1.msra.mxu0 0.0
        %659 = vmatprep.subr.mxu0 0.0
        %660 = vmatpush1.msra.mxu0 0.0
        %661 = vmatprep.subr.mxu0 0.0
        %662 = vmatpush1.msra.mxu0 0.0
        %663 = vmatprep.subr.mxu0 0.0
        %664 = vmatpush1.msra.mxu0 0.0
        %665 = vmatprep.subr.mxu0 0.0
        %666 = vmatpush1.msra.mxu0 0.0
        %667 = vmatprep.mubr.f32.mxu0 0.0
        %v668 = vand.u32 %v444, 4294901760
        %v669 = vsub.f32 %v444, %v668
        %670 = vmatmul.mubr.f32.gmra.mrb[0].mxu0 %v669
        %v671 = vpop.f32.mrb[0].mxu0
        %v672 = vadd.f32 %v598, %v671
        %v673 = vpop.f32.mrb[0].mxu0
        %674 = vdwg.mxu0
        %675 = vmatprep.subr.mxu0 0.0
        %v676 = vand.u32 %v447, 4294901760
        %677 = vmatpush1.msra.mxu0 %v676
        %678 = vmatprep.subr.mxu0 0.0
        %679 = vmatpush1.msra.mxu0 0.0
        %680 = vmatprep.subr.mxu0 0.0
        %681 = vmatpush1.msra.mxu0 0.0
        %682 = vmatprep.subr.mxu0 0.0
        %683 = vmatpush1.msra.mxu0 0.0
        %684 = vmatprep.subr.mxu0 0.0
        %685 = vmatpush1.msra.mxu0 0.0
        %686 = vmatprep.subr.mxu0 0.0
        %687 = vmatpush1.msra.mxu0 0.0
        %688 = vmatprep.subr.mxu0 0.0
        %689 = vmatpush1.msra.mxu0 0.0
        %690 = vmatprep.subr.mxu0 0.0
        %691 = vmatpush1.msra.mxu0 0.0
        %692 = vmatprep.subr.mxu0 0.0
        %693 = vmatpush1.msra.mxu0 0.0
        %694 = vmatprep.subr.mxu0 0.0
        %695 = vmatpush1.msra.mxu0 0.0
        %696 = vmatprep.subr.mxu0 0.0
        %697 = vmatpush1.msra.mxu0 0.0
        %698 = vmatprep.subr.mxu0 0.0
        %699 = vmatpush1.msra.mxu0 0.0
        %700 = vmatprep.subr.mxu0 0.0
        %701 = vmatpush1.msra.mxu0 0.0
        %702 = vmatprep.subr.mxu0 0.0
        %703 = vmatpush1.msra.mxu0 0.0
        %704 = vmatprep.subr.mxu0 0.0
        %705 = vmatpush1.msra.mxu0 0.0
        %706 = vmatprep.subr.mxu0 0.0
        %707 = vmatpush1.msra.mxu0 0.0
        %708 = vmatprep.subr.mxu0 0.0
        %709 = vmatpush1.msra.mxu0 0.0
        %710 = vmatprep.subr.mxu0 0.0
        %711 = vmatpush1.msra.mxu0 0.0
        %712 = vmatprep.subr.mxu0 0.0
        %713 = vmatpush1.msra.mxu0 0.0
        %714 = vmatprep.subr.mxu0 0.0
        %715 = vmatpush1.msra.mxu0 0.0
        %716 = vmatprep.subr.mxu0 0.0
        %717 = vmatpush1.msra.mxu0 0.0
        %718 = vmatprep.subr.mxu0 0.0
        %719 = vmatpush1.msra.mxu0 0.0
        %720 = vmatprep.subr.mxu0 0.0
        %721 = vmatpush1.msra.mxu0 0.0
        %722 = vmatprep.subr.mxu0 0.0
        %723 = vmatpush1.msra.mxu0 0.0
        %724 = vmatprep.subr.mxu0 0.0
        %725 = vmatpush1.msra.mxu0 0.0
        %726 = vmatprep.subr.mxu0 0.0
        %727 = vmatpush1.msra.mxu0 0.0
        %728 = vmatprep.subr.mxu0 0.0
        %729 = vmatpush1.msra.mxu0 0.0
        %730 = vmatprep.subr.mxu0 0.0
        %731 = vmatpush1.msra.mxu0 0.0
        %732 = vmatprep.subr.mxu0 0.0
        %733 = vmatpush1.msra.mxu0 0.0
        %734 = vmatprep.subr.mxu0 0.0
        %735 = vmatpush1.msra.mxu0 0.0
        %736 = vmatprep.subr.mxu0 0.0
        %737 = vmatpush1.msra.mxu0 0.0
        %738 = vmatprep.subr.mxu0 0.0
        %739 = vmatpush1.msra.mxu0 0.0
        %740 = vmatprep.mubr.f32.mxu0 0.0
        %v741 = vand.u32 %v444, 4294901760
        %v742 = vsub.f32 %v444, %v741
        %v743 = vand.u32 %v742, 4294901760
        %744 = vmatmul.mubr.f32.gmra.mrb[0].mxu0 %v743
        %v745 = vpop.f32.mrb[0].mxu0
        %v746 = vadd.f32 %v672, %v745
        %v747 = vpop.f32.mrb[0].mxu0
        %748 = vdwg.mxu0
        %749 = vmatprep.subr.mxu0 0.0
        %v750 = vand.u32 %v447, 4294901760
        %v751 = vsub.f32 %v447, %v750
        %v752 = vand.u32 %v751, 4294901760
        %753 = vmatpush1.msra.mxu0 %v752
        %754 = vmatprep.subr.mxu0 0.0
        %755 = vmatpush1.msra.mxu0 0.0
        %756 = vmatprep.subr.mxu0 0.0
        %757 = vmatpush1.msra.mxu0 0.0
        %758 = vmatprep.subr.mxu0 0.0
        %759 = vmatpush1.msra.mxu0 0.0
        %760 = vmatprep.subr.mxu0 0.0
        %761 = vmatpush1.msra.mxu0 0.0
        %762 = vmatprep.subr.mxu0 0.0
        %763 = vmatpush1.msra.mxu0 0.0
        %764 = vmatprep.subr.mxu0 0.0
        %765 = vmatpush1.msra.mxu0 0.0
        %766 = vmatprep.subr.mxu0 0.0
        %767 = vmatpush1.msra.mxu0 0.0
        %768 = vmatprep.subr.mxu0 0.0
        %769 = vmatpush1.msra.mxu0 0.0
        %770 = vmatprep.subr.mxu0 0.0
        %771 = vmatpush1.msra.mxu0 0.0
        %772 = vmatprep.subr.mxu0 0.0
        %773 = vmatpush1.msra.mxu0 0.0
        %774 = vmatprep.subr.mxu0 0.0
        %775 = vmatpush1.msra.mxu0 0.0
        %776 = vmatprep.subr.mxu0 0.0
        %777 = vmatpush1.msra.mxu0 0.0
        %778 = vmatprep.subr.mxu0 0.0
        %779 = vmatpush1.msra.mxu0 0.0
        %780 = vmatprep.subr.mxu0 0.0
        %781 = vmatpush1.msra.mxu0 0.0
        %782 = vmatprep.subr.mxu0 0.0
        %783 = vmatpush1.msra.mxu0 0.0
        %784 = vmatprep.subr.mxu0 0.0
        %785 = vmatpush1.msra.mxu0 0.0
        %786 = vmatprep.subr.mxu0 0.0
        %787 = vmatpush1.msra.mxu0 0.0
        %788 = vmatprep.subr.mxu0 0.0
        %789 = vmatpush1.msra.mxu0 0.0
        %790 = vmatprep.subr.mxu0 0.0
        %791 = vmatpush1.msra.mxu0 0.0
        %792 = vmatprep.subr.mxu0 0.0
        %793 = vmatpush1.msra.mxu0 0.0
        %794 = vmatprep.subr.mxu0 0.0
        %795 = vmatpush1.msra.mxu0 0.0
        %796 = vmatprep.subr.mxu0 0.0
        %797 = vmatpush1.msra.mxu0 0.0
        %798 = vmatprep.subr.mxu0 0.0
        %799 = vmatpush1.msra.mxu0 0.0
        %800 = vmatprep.subr.mxu0 0.0
        %801 = vmatpush1.msra.mxu0 0.0
        %802 = vmatprep.subr.mxu0 0.0
        %803 = vmatpush1.msra.mxu0 0.0
        %804 = vmatprep.subr.mxu0 0.0
        %805 = vmatpush1.msra.mxu0 0.0
        %806 = vmatprep.subr.mxu0 0.0
        %807 = vmatpush1.msra.mxu0 0.0
        %808 = vmatprep.subr.mxu0 0.0
        %809 = vmatpush1.msra.mxu0 0.0
        %810 = vmatprep.subr.mxu0 0.0
        %811 = vmatpush1.msra.mxu0 0.0
        %812 = vmatprep.subr.mxu0 0.0
        %813 = vmatpush1.msra.mxu0 0.0
        %814 = vmatprep.subr.mxu0 0.0
        %815 = vmatpush1.msra.mxu0 0.0
        %816 = vmatprep.mubr.f32.mxu0 0.0
        %v817 = vand.u32 %v444, 4294901760
        %818 = vmatmul.mubr.f32.gmra.mrb[0].mxu0 %v817
        %v819 = vpop.f32.mrb[0].mxu0
        %v820 = vadd.f32 %v746, %v819
        %v821 = vpop.f32.mrb[0].mxu0
        %822 = vdwg.mxu0
        %823 = vmatprep.subr.mxu0 0.0
        %v824 = vand.u32 %v447, 4294901760
        %825 = vmatpush1.msra.mxu0 %v824
        %826 = vmatprep.subr.mxu0 0.0
        %827 = vmatpush1.msra.mxu0 0.0
        %828 = vmatprep.subr.mxu0 0.0
        %829 = vmatpush1.msra.mxu0 0.0
        %830 = vmatprep.subr.mxu0 0.0
        %831 = vmatpush1.msra.mxu0 0.0
        %832 = vmatprep.subr.mxu0 0.0
        %833 = vmatpush1.msra.mxu0 0.0
        %834 = vmatprep.subr.mxu0 0.0
        %835 = vmatpush1.msra.mxu0 0.0
        %836 = vmatprep.subr.mxu0 0.0
        %837 = vmatpush1.msra.mxu0 0.0
        %838 = vmatprep.subr.mxu0 0.0
        %839 = vmatpush1.msra.mxu0 0.0
        %840 = vmatprep.subr.mxu0 0.0
        %841 = vmatpush1.msra.mxu0 0.0
        %842 = vmatprep.subr.mxu0 0.0
        %843 = vmatpush1.msra.mxu0 0.0
        %844 = vmatprep.subr.mxu0 0.0
        %845 = vmatpush1.msra.mxu0 0.0
        %846 = vmatprep.subr.mxu0 0.0
        %847 = vmatpush1.msra.mxu0 0.0
        %848 = vmatprep.subr.mxu0 0.0
        %849 = vmatpush1.msra.mxu0 0.0
        %850 = vmatprep.subr.mxu0 0.0
        %851 = vmatpush1.msra.mxu0 0.0
        %852 = vmatprep.subr.mxu0 0.0
        %853 = vmatpush1.msra.mxu0 0.0
        %854 = vmatprep.subr.mxu0 0.0
        %855 = vmatpush1.msra.mxu0 0.0
        %856 = vmatprep.subr.mxu0 0.0
        %857 = vmatpush1.msra.mxu0 0.0
        %858 = vmatprep.subr.mxu0 0.0
        %859 = vmatpush1.msra.mxu0 0.0
        %860 = vmatprep.subr.mxu0 0.0
        %861 = vmatpush1.msra.mxu0 0.0
        %862 = vmatprep.subr.mxu0 0.0
        %863 = vmatpush1.msra.mxu0 0.0
        %864 = vmatprep.subr.mxu0 0.0
        %865 = vmatpush1.msra.mxu0 0.0
        %866 = vmatprep.subr.mxu0 0.0
        %867 = vmatpush1.msra.mxu0 0.0
        %868 = vmatprep.subr.mxu0 0.0
        %869 = vmatpush1.msra.mxu0 0.0
        %870 = vmatprep.subr.mxu0 0.0
        %871 = vmatpush1.msra.mxu0 0.0
        %872 = vmatprep.subr.mxu0 0.0
        %873 = vmatpush1.msra.mxu0 0.0
        %874 = vmatprep.subr.mxu0 0.0
        %875 = vmatpush1.msra.mxu0 0.0
        %876 = vmatprep.subr.mxu0 0.0
        %877 = vmatpush1.msra.mxu0 0.0
        %878 = vmatprep.subr.mxu0 0.0
        %879 = vmatpush1.msra.mxu0 0.0
        %880 = vmatprep.subr.mxu0 0.0
        %881 = vmatpush1.msra.mxu0 0.0
        %882 = vmatprep.subr.mxu0 0.0
        %883 = vmatpush1.msra.mxu0 0.0
        %884 = vmatprep.subr.mxu0 0.0
        %885 = vmatpush1.msra.mxu0 0.0
        %886 = vmatprep.subr.mxu0 0.0
        %887 = vmatpush1.msra.mxu0 0.0
        %888 = vmatprep.mubr.f32.mxu0 0.0
        %v889 = vand.u32 %v444, 4294901760
        %890 = vmatmul.mubr.f32.gmra.mrb[0].mxu0 %v889
        %v891 = vpop.f32.mrb[0].mxu0
        %v892 = vadd.f32 %v820, %v891
        %v893 = vpop.f32.mrb[0].mxu0
        %894 = vdwg.mxu0
        %v896 = vsel %vm442, %v439, 0
        %v899 = vsel %vm446, %v424, 0
        %901 = vmatprep.subr.mxu0 0.0
        %v902 = vand.u32 %v899, 4294901760
        %903 = vmatpush1.msra.mxu0 %v902
        %904 = vmatprep.subr.mxu0 0.0
        %905 = vmatpush1.msra.mxu0 0.0
        %906 = vmatprep.subr.mxu0 0.0
        %907 = vmatpush1.msra.mxu0 0.0
        %908 = vmatprep.subr.mxu0 0.0
        %909 = vmatpush1.msra.mxu0 0.0
        %910 = vmatprep.subr.mxu0 0.0
        %911 = vmatpush1.msra.mxu0 0.0
        %912 = vmatprep.subr.mxu0 0.0
        %913 = vmatpush1.msra.mxu0 0.0
        %914 = vmatprep.subr.mxu0 0.0
        %915 = vmatpush1.msra.mxu0 0.0
        %916 = vmatprep.subr.mxu0 0.0
        %917 = vmatpush1.msra.mxu0 0.0
        %918 = vmatprep.subr.mxu0 0.0
        %919 = vmatpush1.msra.mxu0 0.0
        %920 = vmatprep.subr.mxu0 0.0
        %921 = vmatpush1.msra.mxu0 0.0
        %922 = vmatprep.subr.mxu0 0.0
        %923 = vmatpush1.msra.mxu0 0.0
        %924 = vmatprep.subr.mxu0 0.0
        %925 = vmatpush1.msra.mxu0 0.0
        %926 = vmatprep.subr.mxu0 0.0
        %927 = vmatpush1.msra.mxu0 0.0
        %928 = vmatprep.subr.mxu0 0.0
        %929 = vmatpush1.msra.mxu0 0.0
        %930 = vmatprep.subr.mxu0 0.0
        %931 = vmatpush1.msra.mxu0 0.0
        %932 = vmatprep.subr.mxu0 0.0
        %933 = vmatpush1.msra.mxu0 0.0
        %934 = vmatprep.subr.mxu0 0.0
        %935 = vmatpush1.msra.mxu0 0.0
        %936 = vmatprep.subr.mxu0 0.0
        %937 = vmatpush1.msra.mxu0 0.0
        %938 = vmatprep.subr.mxu0 0.0
        %939 = vmatpush1.msra.mxu0 0.0
        %940 = vmatprep.subr.mxu0 0.0
        %941 = vmatpush1.msra.mxu0 0.0
        %942 = vmatprep.subr.mxu0 0.0
        %943 = vmatpush1.msra.mxu0 0.0
        %944 = vmatprep.subr.mxu0 0.0
        %945 = vmatpush1.msra.mxu0 0.0
        %946 = vmatprep.subr.mxu0 0.0
        %947 = vmatpush1.msra.mxu0 0.0
        %948 = vmatprep.subr.mxu0 0.0
        %949 = vmatpush1.msra.mxu0 0.0
        %950 = vmatprep.subr.mxu0 0.0
        %951 = vmatpush1.msra.mxu0 0.0
        %952 = vmatprep.subr.mxu0 0.0
        %953 = vmatpush1.msra.mxu0 0.0
        %954 = vmatprep.subr.mxu0 0.0
        %955 = vmatpush1.msra.mxu0 0.0
        %956 = vmatprep.subr.mxu0 0.0
        %957 = vmatpush1.msra.mxu0 0.0
        %958 = vmatprep.subr.mxu0 0.0
        %959 = vmatpush1.msra.mxu0 0.0
        %960 = vmatprep.subr.mxu0 0.0
        %961 = vmatpush1.msra.mxu0 0.0
        %962 = vmatprep.subr.mxu0 0.0
        %963 = vmatpush1.msra.mxu0 0.0
        %964 = vmatprep.subr.mxu0 0.0
        %965 = vmatpush1.msra.mxu0 0.0
        %966 = vmatprep.mubr.f32.mxu0 0.0
        %v967 = vand.u32 %v896, 4294901760
        %v968 = vsub.f32 %v896, %v967
        %v969 = vand.u32 %v968, 4294901760
        %v970 = vsub.f32 %v968, %v969
        %v971 = vand.u32 %v970, 4294901760
        %972 = vmatmul.mubr.f32.gmra.mrb[0].mxu0 %v971
        %v973 = vpop.f32.mrb[0].mxu0
        %v974 = vadd.f32 %v892, %v973
        %v975 = vpop.f32.mrb[0].mxu0
        %976 = vdwg.mxu0
        %977 = vmatprep.subr.mxu0 0.0
        %v978 = vand.u32 %v899, 4294901760
        %v979 = vsub.f32 %v899, %v978
        %v980 = vand.u32 %v979, 4294901760
        %v981 = vsub.f32 %v979, %v980
        %v982 = vand.u32 %v981, 4294901760
        %983 = vmatpush1.msra.mxu0 %v982
        %984 = vmatprep.subr.mxu0 0.0
        %985 = vmatpush1.msra.mxu0 0.0
        %986 = vmatprep.subr.mxu0 0.0
        %987 = vmatpush1.msra.mxu0 0.0
        %988 = vmatprep.subr.mxu0 0.0
        %989 = vmatpush1.msra.mxu0 0.0
        %990 = vmatprep.subr.mxu0 0.0
        %991 = vmatpush1.msra.mxu0 0.0
        %992 = vmatprep.subr.mxu0 0.0
        %993 = vmatpush1.msra.mxu0 0.0
        %994 = vmatprep.subr.mxu0 0.0
        %995 = vmatpush1.msra.mxu0 0.0
        %996 = vmatprep.subr.mxu0 0.0
        %997 = vmatpush1.msra.mxu0 0.0
        %998 = vmatprep.subr.mxu0 0.0
        %999 = vmatpush1.msra.mxu0 0.0
        %1000 = vmatprep.subr.mxu0 0.0
        %1001 = vmatpush1.msra.mxu0 0.0
        %1002 = vmatprep.subr.mxu0 0.0
        %1003 = vmatpush1.msra.mxu0 0.0
        %1004 = vmatprep.subr.mxu0 0.0
        %1005 = vmatpush1.msra.mxu0 0.0
        %1006 = vmatprep.subr.mxu0 0.0
        %1007 = vmatpush1.msra.mxu0 0.0
        %1008 = vmatprep.subr.mxu0 0.0
        %1009 = vmatpush1.msra.mxu0 0.0
        %1010 = vmatprep.subr.mxu0 0.0
        %1011 = vmatpush1.msra.mxu0 0.0
        %1012 = vmatprep.subr.mxu0 0.0
        %1013 = vmatpush1.msra.mxu0 0.0
        %1014 = vmatprep.subr.mxu0 0.0
        %1015 = vmatpush1.msra.mxu0 0.0
        %1016 = vmatprep.subr.mxu0 0.0
        %1017 = vmatpush1.msra.mxu0 0.0
        %1018 = vmatprep.subr.mxu0 0.0
        %1019 = vmatpush1.msra.mxu0 0.0
        %1020 = vmatprep.subr.mxu0 0.0
        %1021 = vmatpush1.msra.mxu0 0.0
        %1022 = vmatprep.subr.mxu0 0.0
        %1023 = vmatpush1.msra.mxu0 0.0
        %1024 = vmatprep.subr.mxu0 0.0
        %1025 = vmatpush1.msra.mxu0 0.0
        %1026 = vmatprep.subr.mxu0 0.0
        %1027 = vmatpush1.msra.mxu0 0.0
        %1028 = vmatprep.subr.mxu0 0.0
        %1029 = vmatpush1.msra.mxu0 0.0
        %1030 = vmatprep.subr.mxu0 0.0
        %1031 = vmatpush1.msra.mxu0 0.0
        %1032 = vmatprep.subr.mxu0 0.0
        %1033 = vmatpush1.msra.mxu0 0.0
        %1034 = vmatprep.subr.mxu0 0.0
        %1035 = vmatpush1.msra.mxu0 0.0
        %1036 = vmatprep.subr.mxu0 0.0
        %1037 = vmatpush1.msra.mxu0 0.0
        %1038 = vmatprep.subr.mxu0 0.0
        %1039 = vmatpush1.msra.mxu0 0.0
        %1040 = vmatprep.subr.mxu0 0.0
        %1041 = vmatpush1.msra.mxu0 0.0
        %1042 = vmatprep.subr.mxu0 0.0
        %1043 = vmatpush1.msra.mxu0 0.0
        %1044 = vmatprep.subr.mxu0 0.0
        %1045 = vmatpush1.msra.mxu0 0.0
        %1046 = vmatprep.mubr.f32.mxu0 0.0
        %v1047 = vand.u32 %v896, 4294901760
        %1048 = vmatmul.mubr.f32.gmra.mrb[0].mxu0 %v1047
        %v1049 = vpop.f32.mrb[0].mxu0
        %v1050 = vadd.f32 %v974, %v1049
        %v1051 = vpop.f32.mrb[0].mxu0
        %1052 = vdwg.mxu0
        %1053 = vmatprep.subr.mxu0 0.0
        %v1054 = vand.u32 %v899, 4294901760
        %v1055 = vsub.f32 %v899, %v1054
        %1056 = vmatpush1.msra.mxu0 %v1055
        %1057 = vmatprep.subr.mxu0 0.0
        %1058 = vmatpush1.msra.mxu0 0.0
        %1059 = vmatprep.subr.mxu0 0.0
        %1060 = vmatpush1.msra.mxu0 0.0
        %1061 = vmatprep.subr.mxu0 0.0
        %1062 = vmatpush1.msra.mxu0 0.0
        %1063 = vmatprep.subr.mxu0 0.0
        %1064 = vmatpush1.msra.mxu0 0.0
        %1065 = vmatprep.subr.mxu0 0.0
        %1066 = vmatpush1.msra.mxu0 0.0
        %1067 = vmatprep.subr.mxu0 0.0
        %1068 = vmatpush1.msra.mxu0 0.0
        %1069 = vmatprep.subr.mxu0 0.0
        %1070 = vmatpush1.msra.mxu0 0.0
        %1071 = vmatprep.subr.mxu0 0.0
        %1072 = vmatpush1.msra.mxu0 0.0
        %1073 = vmatprep.subr.mxu0 0.0
        %1074 = vmatpush1.msra.mxu0 0.0
        %1075 = vmatprep.subr.mxu0 0.0
        %1076 = vmatpush1.msra.mxu0 0.0
        %1077 = vmatprep.subr.mxu0 0.0
        %1078 = vmatpush1.msra.mxu0 0.0
        %1079 = vmatprep.subr.mxu0 0.0
        %1080 = vmatpush1.msra.mxu0 0.0
        %1081 = vmatprep.subr.mxu0 0.0
        %1082 = vmatpush1.msra.mxu0 0.0
        %1083 = vmatprep.subr.mxu0 0.0
        %1084 = vmatpush1.msra.mxu0 0.0
        %1085 = vmatprep.subr.mxu0 0.0
        %1086 = vmatpush1.msra.mxu0 0.0
        %1087 = vmatprep.subr.mxu0 0.0
        %1088 = vmatpush1.msra.mxu0 0.0
        %1089 = vmatprep.subr.mxu0 0.0
        %1090 = vmatpush1.msra.mxu0 0.0
        %1091 = vmatprep.subr.mxu0 0.0
        %1092 = vmatpush1.msra.mxu0 0.0
        %1093 = vmatprep.subr.mxu0 0.0
        %1094 = vmatpush1.msra.mxu0 0.0
        %1095 = vmatprep.subr.mxu0 0.0
        %1096 = vmatpush1.msra.mxu0 0.0
        %1097 = vmatprep.subr.mxu0 0.0
        %1098 = vmatpush1.msra.mxu0 0.0
        %1099 = vmatprep.subr.mxu0 0.0
        %1100 = vmatpush1.msra.mxu0 0.0
        %1101 = vmatprep.subr.mxu0 0.0
        %1102 = vmatpush1.msra.mxu0 0.0
        %1103 = vmatprep.subr.mxu0 0.0
        %1104 = vmatpush1.msra.mxu0 0.0
        %1105 = vmatprep.subr.mxu0 0.0
        %1106 = vmatpush1.msra.mxu0 0.0
        %1107 = vmatprep.subr.mxu0 0.0
        %1108 = vmatpush1.msra.mxu0 0.0
        %1109 = vmatprep.subr.mxu0 0.0
        %1110 = vmatpush1.msra.mxu0 0.0
        %1111 = vmatprep.subr.mxu0 0.0
        %1112 = vmatpush1.msra.mxu0 0.0
        %1113 = vmatprep.subr.mxu0 0.0
        %1114 = vmatpush1.msra.mxu0 0.0
        %1115 = vmatprep.subr.mxu0 0.0
        %1116 = vmatpush1.msra.mxu0 0.0
        %1117 = vmatprep.subr.mxu0 0.0
        %1118 = vmatpush1.msra.mxu0 0.0
        %1119 = vmatprep.mubr.f32.mxu0 0.0
        %v1120 = vand.u32 %v896, 4294901760
        %v1121 = vsub.f32 %v896, %v1120
        %1122 = vmatmul.mubr.f32.gmra.mrb[0].mxu0 %v1121
        %v1123 = vpop.f32.mrb[0].mxu0
        %v1124 = vadd.f32 %v1050, %v1123
        %v1125 = vpop.f32.mrb[0].mxu0
        %1126 = vdwg.mxu0
        %1127 = vmatprep.subr.mxu0 0.0
        %v1128 = vand.u32 %v899, 4294901760
        %1129 = vmatpush1.msra.mxu0 %v1128
        %1130 = vmatprep.subr.mxu0 0.0
        %1131 = vmatpush1.msra.mxu0 0.0
        %1132 = vmatprep.subr.mxu0 0.0
        %1133 = vmatpush1.msra.mxu0 0.0
        %1134 = vmatprep.subr.mxu0 0.0
        %1135 = vmatpush1.msra.mxu0 0.0
        %1136 = vmatprep.subr.mxu0 0.0
        %1137 = vmatpush1.msra.mxu0 0.0
        %1138 = vmatprep.subr.mxu0 0.0
        %1139 = vmatpush1.msra.mxu0 0.0
        %1140 = vmatprep.subr.mxu0 0.0
        %1141 = vmatpush1.msra.mxu0 0.0
        %1142 = vmatprep.subr.mxu0 0.0
        %1143 = vmatpush1.msra.mxu0 0.0
        %1144 = vmatprep.subr.mxu0 0.0
        %1145 = vmatpush1.msra.mxu0 0.0
        %1146 = vmatprep.subr.mxu0 0.0
        %1147 = vmatpush1.msra.mxu0 0.0
        %1148 = vmatprep.subr.mxu0 0.0
        %1149 = vmatpush1.msra.mxu0 0.0
        %1150 = vmatprep.subr.mxu0 0.0
        %1151 = vmatpush1.msra.mxu0 0.0
        %1152 = vmatprep.subr.mxu0 0.0
        %1153 = vmatpush1.msra.mxu0 0.0
        %1154 = vmatprep.subr.mxu0 0.0
        %1155 = vmatpush1.msra.mxu0 0.0
        %1156 = vmatprep.subr.mxu0 0.0
        %1157 = vmatpush1.msra.mxu0 0.0
        %1158 = vmatprep.subr.mxu0 0.0
        %1159 = vmatpush1.msra.mxu0 0.0
        %1160 = vmatprep.subr.mxu0 0.0
        %1161 = vmatpush1.msra.mxu0 0.0
        %1162 = vmatprep.subr.mxu0 0.0
        %1163 = vmatpush1.msra.mxu0 0.0
        %1164 = vmatprep.subr.mxu0 0.0
        %1165 = vmatpush1.msra.mxu0 0.0
        %1166 = vmatprep.subr.mxu0 0.0
        %1167 = vmatpush1.msra.mxu0 0.0
        %1168 = vmatprep.subr.mxu0 0.0
        %1169 = vmatpush1.msra.mxu0 0.0
        %1170 = vmatprep.subr.mxu0 0.0
        %1171 = vmatpush1.msra.mxu0 0.0
        %1172 = vmatprep.subr.mxu0 0.0
        %1173 = vmatpush1.msra.mxu0 0.0
        %1174 = vmatprep.subr.mxu0 0.0
        %1175 = vmatpush1.msra.mxu0 0.0
        %1176 = vmatprep.subr.mxu0 0.0
        %1177 = vmatpush1.msra.mxu0 0.0
        %1178 = vmatprep.subr.mxu0 0.0
        %1179 = vmatpush1.msra.mxu0 0.0
        %1180 = vmatprep.subr.mxu0 0.0
        %1181 = vmatpush1.msra.mxu0 0.0
        %1182 = vmatprep.subr.mxu0 0.0
        %1183 = vmatpush1.msra.mxu0 0.0
        %1184 = vmatprep.subr.mxu0 0.0
        %1185 = vmatpush1.msra.mxu0 0.0
        %1186 = vmatprep.subr.mxu0 0.0
        %1187 = vmatpush1.msra.mxu0 0.0
        %1188 = vmatprep.subr.mxu0 0.0
        %1189 = vmatpush1.msra.mxu0 0.0
        %1190 = vmatprep.subr.mxu0 0.0
        %1191 = vmatpush1.msra.mxu0 0.0
        %1192 = vmatprep.mubr.f32.mxu0 0.0
        %v1193 = vand.u32 %v896, 4294901760
        %v1194 = vsub.f32 %v896, %v1193
        %v1195 = vand.u32 %v1194, 4294901760
        %1196 = vmatmul.mubr.f32.gmra.mrb[0].mxu0 %v1195
        %v1197 = vpop.f32.mrb[0].mxu0
        %v1198 = vadd.f32 %v1124, %v1197
        %v1199 = vpop.f32.mrb[0].mxu0
        %1200 = vdwg.mxu0
        %1201 = vmatprep.subr.mxu0 0.0
        %v1202 = vand.u32 %v899, 4294901760
        %v1203 = vsub.f32 %v899, %v1202
        %v1204 = vand.u32 %v1203, 4294901760
        %1205 = vmatpush1.msra.mxu0 %v1204
        %1206 = vmatprep.subr.mxu0 0.0
        %1207 = vmatpush1.msra.mxu0 0.0
        %1208 = vmatprep.subr.mxu0 0.0
        %1209 = vmatpush1.msra.mxu0 0.0
        %1210 = vmatprep.subr.mxu0 0.0
        %1211 = vmatpush1.msra.mxu0 0.0
        %1212 = vmatprep.subr.mxu0 0.0
        %1213 = vmatpush1.msra.mxu0 0.0
        %1214 = vmatprep.subr.mxu0 0.0
        %1215 = vmatpush1.msra.mxu0 0.0
        %1216 = vmatprep.subr.mxu0 0.0
        %1217 = vmatpush1.msra.mxu0 0.0
        %1218 = vmatprep.subr.mxu0 0.0
        %1219 = vmatpush1.msra.mxu0 0.0
        %1220 = vmatprep.subr.mxu0 0.0
        %1221 = vmatpush1.msra.mxu0 0.0
        %1222 = vmatprep.subr.mxu0 0.0
        %1223 = vmatpush1.msra.mxu0 0.0
        %1224 = vmatprep.subr.mxu0 0.0
        %1225 = vmatpush1.msra.mxu0 0.0
        %1226 = vmatprep.subr.mxu0 0.0
        %1227 = vmatpush1.msra.mxu0 0.0
        %1228 = vmatprep.subr.mxu0 0.0
        %1229 = vmatpush1.msra.mxu0 0.0
        %1230 = vmatprep.subr.mxu0 0.0
        %1231 = vmatpush1.msra.mxu0 0.0
        %1232 = vmatprep.subr.mxu0 0.0
        %1233 = vmatpush1.msra.mxu0 0.0
        %1234 = vmatprep.subr.mxu0 0.0
        %1235 = vmatpush1.msra.mxu0 0.0
        %1236 = vmatprep.subr.mxu0 0.0
        %1237 = vmatpush1.msra.mxu0 0.0
        %1238 = vmatprep.subr.mxu0 0.0
        %1239 = vmatpush1.msra.mxu0 0.0
        %1240 = vmatprep.subr.mxu0 0.0
        %1241 = vmatpush1.msra.mxu0 0.0
        %1242 = vmatprep.subr.mxu0 0.0
        %1243 = vmatpush1.msra.mxu0 0.0
        %1244 = vmatprep.subr.mxu0 0.0
        %1245 = vmatpush1.msra.mxu0 0.0
        %1246 = vmatprep.subr.mxu0 0.0
        %1247 = vmatpush1.msra.mxu0 0.0
        %1248 = vmatprep.subr.mxu0 0.0
        %1249 = vmatpush1.msra.mxu0 0.0
        %1250 = vmatprep.subr.mxu0 0.0
        %1251 = vmatpush1.msra.mxu0 0.0
        %1252 = vmatprep.subr.mxu0 0.0
        %1253 = vmatpush1.msra.mxu0 0.0
        %1254 = vmatprep.subr.mxu0 0.0
        %1255 = vmatpush1.msra.mxu0 0.0
        %1256 = vmatprep.subr.mxu0 0.0
        %1257 = vmatpush1.msra.mxu0 0.0
        %1258 = vmatprep.subr.mxu0 0.0
        %1259 = vmatpush1.msra.mxu0 0.0
        %1260 = vmatprep.subr.mxu0 0.0
        %1261 = vmatpush1.msra.mxu0 0.0
        %1262 = vmatprep.subr.mxu0 0.0
        %1263 = vmatpush1.msra.mxu0 0.0
        %1264 = vmatprep.subr.mxu0 0.0
        %1265 = vmatpush1.msra.mxu0 0.0
        %1266 = vmatprep.subr.mxu0 0.0
        %1267 = vmatpush1.msra.mxu0 0.0
        %1268 = vmatprep.mubr.f32.mxu0 0.0
        %v1269 = vand.u32 %v896, 4294901760
        %1270 = vmatmul.mubr.f32.gmra.mrb[0].mxu0 %v1269
        %v1271 = vpop.f32.mrb[0].mxu0
        %v1272 = vadd.f32 %v1198, %v1271
        %v1273 = vpop.f32.mrb[0].mxu0
        %1274 = vdwg.mxu0
        %1275 = vmatprep.subr.mxu0 0.0
        %v1276 = vand.u32 %v899, 4294901760
        %1277 = vmatpush1.msra.mxu0 %v1276
        %1278 = vmatprep.subr.mxu0 0.0
        %1279 = vmatpush1.msra.mxu0 0.0
        %1280 = vmatprep.subr.mxu0 0.0
        %1281 = vmatpush1.msra.mxu0 0.0
        %1282 = vmatprep.subr.mxu0 0.0
        %1283 = vmatpush1.msra.mxu0 0.0
        %1284 = vmatprep.subr.mxu0 0.0
        %1285 = vmatpush1.msra.mxu0 0.0
        %1286 = vmatprep.subr.mxu0 0.0
        %1287 = vmatpush1.msra.mxu0 0.0
        %1288 = vmatprep.subr.mxu0 0.0
        %1289 = vmatpush1.msra.mxu0 0.0
        %1290 = vmatprep.subr.mxu0 0.0
        %1291 = vmatpush1.msra.mxu0 0.0
        %1292 = vmatprep.subr.mxu0 0.0
        %1293 = vmatpush1.msra.mxu0 0.0
        %1294 = vmatprep.subr.mxu0 0.0
        %1295 = vmatpush1.msra.mxu0 0.0
        %1296 = vmatprep.subr.mxu0 0.0
        %1297 = vmatpush1.msra.mxu0 0.0
        %1298 = vmatprep.subr.mxu0 0.0
        %1299 = vmatpush1.msra.mxu0 0.0
        %1300 = vmatprep.subr.mxu0 0.0
        %1301 = vmatpush1.msra.mxu0 0.0
        %1302 = vmatprep.subr.mxu0 0.0
        %1303 = vmatpush1.msra.mxu0 0.0
        %1304 = vmatprep.subr.mxu0 0.0
        %1305 = vmatpush1.msra.mxu0 0.0
        %1306 = vmatprep.subr.mxu0 0.0
        %1307 = vmatpush1.msra.mxu0 0.0
        %1308 = vmatprep.subr.mxu0 0.0
        %1309 = vmatpush1.msra.mxu0 0.0
        %1310 = vmatprep.subr.mxu0 0.0
        %1311 = vmatpush1.msra.mxu0 0.0
        %1312 = vmatprep.subr.mxu0 0.0
        %1313 = vmatpush1.msra.mxu0 0.0
        %1314 = vmatprep.subr.mxu0 0.0
        %1315 = vmatpush1.msra.mxu0 0.0
        %1316 = vmatprep.subr.mxu0 0.0
        %1317 = vmatpush1.msra.mxu0 0.0
        %1318 = vmatprep.subr.mxu0 0.0
        %1319 = vmatpush1.msra.mxu0 0.0
        %1320 = vmatprep.subr.mxu0 0.0
        %1321 = vmatpush1.msra.mxu0 0.0
        %1322 = vmatprep.subr.mxu0 0.0
        %1323 = vmatpush1.msra.mxu0 0.0
        %1324 = vmatprep.subr.mxu0 0.0
        %1325 = vmatpush1.msra.mxu0 0.0
        %1326 = vmatprep.subr.mxu0 0.0
        %1327 = vmatpush1.msra.mxu0 0.0
        %1328 = vmatprep.subr.mxu0 0.0
        %1329 = vmatpush1.msra.mxu0 0.0
        %1330 = vmatprep.subr.mxu0 0.0
        %1331 = vmatpush1.msra.mxu0 0.0
        %1332 = vmatprep.subr.mxu0 0.0
        %1333 = vmatpush1.msra.mxu0 0.0
        %1334 = vmatprep.subr.mxu0 0.0
        %1335 = vmatpush1.msra.mxu0 0.0
        %1336 = vmatprep.subr.mxu0 0.0
        %1337 = vmatpush1.msra.mxu0 0.0
        %1338 = vmatprep.subr.mxu0 0.0
        %1339 = vmatpush1.msra.mxu0 0.0
        %1340 = vmatprep.mubr.f32.mxu0 0.0
        %v1341 = vand.u32 %v896, 4294901760
        %1342 = vmatmul.mubr.f32.gmra.mrb[0].mxu0 %v1341
        %v1343 = vpop.f32.mrb[0].mxu0
        %v1344 = vadd.f32 %v1272, %v1343
        %v1345 = vpop.f32.mrb[0].mxu0
        %1346 = vdwg.mxu0
        %s1347 = scalar_lea.vmem %s3, 8
        %v1348 = vld [vmem:[%s1347] sm:$0xf]
        %v1350 = vsel %vm442, %v1348, 0
        %v1353 = vsel %vm446, %v438, 0
        %1355 = vmatprep.subr.mxu0 0.0
        %v1356 = vand.u32 %v1353, 4294901760
        %1357 = vmatpush1.msra.mxu0 %v1356
        %1358 = vmatprep.subr.mxu0 0.0
        %1359 = vmatpush1.msra.mxu0 0.0
        %1360 = vmatprep.subr.mxu0 0.0
        %1361 = vmatpush1.msra.mxu0 0.0
        %1362 = vmatprep.subr.mxu0 0.0
        %1363 = vmatpush1.msra.mxu0 0.0
        %1364 = vmatprep.subr.mxu0 0.0
        %1365 = vmatpush1.msra.mxu0 0.0
        %1366 = vmatprep.subr.mxu0 0.0
        %1367 = vmatpush1.msra.mxu0 0.0
        %1368 = vmatprep.subr.mxu0 0.0
        %1369 = vmatpush1.msra.mxu0 0.0
        %1370 = vmatprep.subr.mxu0 0.0
        %1371 = vmatpush1.msra.mxu0 0.0
        %1372 = vmatprep.subr.mxu0 0.0
        %1373 = vmatpush1.msra.mxu0 0.0
        %1374 = vmatprep.subr.mxu0 0.0
        %1375 = vmatpush1.msra.mxu0 0.0
        %1376 = vmatprep.subr.mxu0 0.0
        %1377 = vmatpush1.msra.mxu0 0.0
        %1378 = vmatprep.subr.mxu0 0.0
        %1379 = vmatpush1.msra.mxu0 0.0
        %1380 = vmatprep.subr.mxu0 0.0
        %1381 = vmatpush1.msra.mxu0 0.0
        %1382 = vmatprep.subr.mxu0 0.0
        %1383 = vmatpush1.msra.mxu0 0.0
        %1384 = vmatprep.subr.mxu0 0.0
        %1385 = vmatpush1.msra.mxu0 0.0
        %1386 = vmatprep.subr.mxu0 0.0
        %1387 = vmatpush1.msra.mxu0 0.0
        %1388 = vmatprep.subr.mxu0 0.0
        %1389 = vmatpush1.msra.mxu0 0.0
        %1390 = vmatprep.subr.mxu0 0.0
        %1391 = vmatpush1.msra.mxu0 0.0
        %1392 = vmatprep.subr.mxu0 0.0
        %1393 = vmatpush1.msra.mxu0 0.0
        %1394 = vmatprep.subr.mxu0 0.0
        %1395 = vmatpush1.msra.mxu0 0.0
        %1396 = vmatprep.subr.mxu0 0.0
        %1397 = vmatpush1.msra.mxu0 0.0
        %1398 = vmatprep.subr.mxu0 0.0
        %1399 = vmatpush1.msra.mxu0 0.0
        %1400 = vmatprep.subr.mxu0 0.0
        %1401 = vmatpush1.msra.mxu0 0.0
        %1402 = vmatprep.subr.mxu0 0.0
        %1403 = vmatpush1.msra.mxu0 0.0
        %1404 = vmatprep.subr.mxu0 0.0
        %1405 = vmatpush1.msra.mxu0 0.0
        %1406 = vmatprep.subr.mxu0 0.0
        %1407 = vmatpush1.msra.mxu0 0.0
        %1408 = vmatprep.subr.mxu0 0.0
        %1409 = vmatpush1.msra.mxu0 0.0
        %1410 = vmatprep.subr.mxu0 0.0
        %1411 = vmatpush1.msra.mxu0 0.0
        %1412 = vmatprep.subr.mxu0 0.0
        %1413 = vmatpush1.msra.mxu0 0.0
        %1414 = vmatprep.subr.mxu0 0.0
        %1415 = vmatpush1.msra.mxu0 0.0
        %1416 = vmatprep.subr.mxu0 0.0
        %1417 = vmatpush1.msra.mxu0 0.0
        %1418 = vmatprep.subr.mxu0 0.0
        %1419 = vmatpush1.msra.mxu0 0.0
        %1420 = vmatprep.mubr.f32.mxu0 0.0
        %v1421 = vand.u32 %v1350, 4294901760
        %v1422 = vsub.f32 %v1350, %v1421
        %v1423 = vand.u32 %v1422, 4294901760
        %v1424 = vsub.f32 %v1422, %v1423
        %v1425 = vand.u32 %v1424, 4294901760
        %1426 = vmatmul.mubr.f32.gmra.mrb[0].mxu0 %v1425
        %v1427 = vpop.f32.mrb[0].mxu0
        %v1428 = vadd.f32 0.0, %v1427
        %v1429 = vpop.f32.mrb[0].mxu0
        %1430 = vdwg.mxu0
        %1431 = vmatprep.subr.mxu0 0.0
        %v1432 = vand.u32 %v1353, 4294901760
        %v1433 = vsub.f32 %v1353, %v1432
        %v1434 = vand.u32 %v1433, 4294901760
        %v1435 = vsub.f32 %v1433, %v1434
        %v1436 = vand.u32 %v1435, 4294901760
        %1437 = vmatpush1.msra.mxu0 %v1436
        %1438 = vmatprep.subr.mxu0 0.0
        %1439 = vmatpush1.msra.mxu0 0.0
        %1440 = vmatprep.subr.mxu0 0.0
        %1441 = vmatpush1.msra.mxu0 0.0
        %1442 = vmatprep.subr.mxu0 0.0
        %1443 = vmatpush1.msra.mxu0 0.0
        %1444 = vmatprep.subr.mxu0 0.0
        %1445 = vmatpush1.msra.mxu0 0.0
        %1446 = vmatprep.subr.mxu0 0.0
        %1447 = vmatpush1.msra.mxu0 0.0
        %1448 = vmatprep.subr.mxu0 0.0
        %1449 = vmatpush1.msra.mxu0 0.0
        %1450 = vmatprep.subr.mxu0 0.0
        %1451 = vmatpush1.msra.mxu0 0.0
        %1452 = vmatprep.subr.mxu0 0.0
        %1453 = vmatpush1.msra.mxu0 0.0
        %1454 = vmatprep.subr.mxu0 0.0
        %1455 = vmatpush1.msra.mxu0 0.0
        %1456 = vmatprep.subr.mxu0 0.0
        %1457 = vmatpush1.msra.mxu0 0.0
        %1458 = vmatprep.subr.mxu0 0.0
        %1459 = vmatpush1.msra.mxu0 0.0
        %1460 = vmatprep.subr.mxu0 0.0
        %1461 = vmatpush1.msra.mxu0 0.0
        %1462 = vmatprep.subr.mxu0 0.0
        %1463 = vmatpush1.msra.mxu0 0.0
        %1464 = vmatprep.subr.mxu0 0.0
        %1465 = vmatpush1.msra.mxu0 0.0
        %1466 = vmatprep.subr.mxu0 0.0
        %1467 = vmatpush1.msra.mxu0 0.0
        %1468 = vmatprep.subr.mxu0 0.0
        %1469 = vmatpush1.msra.mxu0 0.0
        %1470 = vmatprep.subr.mxu0 0.0
        %1471 = vmatpush1.msra.mxu0 0.0
        %1472 = vmatprep.subr.mxu0 0.0
        %1473 = vmatpush1.msra.mxu0 0.0
        %1474 = vmatprep.subr.mxu0 0.0
        %1475 = vmatpush1.msra.mxu0 0.0
        %1476 = vmatprep.subr.mxu0 0.0
        %1477 = vmatpush1.msra.mxu0 0.0
        %1478 = vmatprep.subr.mxu0 0.0
        %1479 = vmatpush1.msra.mxu0 0.0
        %1480 = vmatprep.subr.mxu0 0.0
        %1481 = vmatpush1.msra.mxu0 0.0
        %1482 = vmatprep.subr.mxu0 0.0
        %1483 = vmatpush1.msra.mxu0 0.0
        %1484 = vmatprep.subr.mxu0 0.0
        %1485 = vmatpush1.msra.mxu0 0.0
        %1486 = vmatprep.subr.mxu0 0.0
        %1487 = vmatpush1.msra.mxu0 0.0
        %1488 = vmatprep.subr.mxu0 0.0
        %1489 = vmatpush1.msra.mxu0 0.0
        %1490 = vmatprep.subr.mxu0 0.0
        %1491 = vmatpush1.msra.mxu0 0.0
        %1492 = vmatprep.subr.mxu0 0.0
        %1493 = vmatpush1.msra.mxu0 0.0
        %1494 = vmatprep.subr.mxu0 0.0
        %1495 = vmatpush1.msra.mxu0 0.0
        %1496 = vmatprep.subr.mxu0 0.0
        %1497 = vmatpush1.msra.mxu0 0.0
        %1498 = vmatprep.subr.mxu0 0.0
        %1499 = vmatpush1.msra.mxu0 0.0
        %1500 = vmatprep.mubr.f32.mxu0 0.0
        %v1501 = vand.u32 %v1350, 4294901760
        %1502 = vmatmul.mubr.f32.gmra.mrb[0].mxu0 %v1501
        %v1503 = vpop.f32.mrb[0].mxu0
        %v1504 = vadd.f32 %v1428, %v1503
        %v1505 = vpop.f32.mrb[0].mxu0
        %1506 = vdwg.mxu0
        %1507 = vmatprep.subr.mxu0 0.0
        %v1508 = vand.u32 %v1353, 4294901760
        %v1509 = vsub.f32 %v1353, %v1508
        %1510 = vmatpush1.msra.mxu0 %v1509
        %1511 = vmatprep.subr.mxu0 0.0
        %1512 = vmatpush1.msra.mxu0 0.0
        %1513 = vmatprep.subr.mxu0 0.0
        %1514 = vmatpush1.msra.mxu0 0.0
        %1515 = vmatprep.subr.mxu0 0.0
        %1516 = vmatpush1.msra.mxu0 0.0
        %1517 = vmatprep.subr.mxu0 0.0
        %1518 = vmatpush1.msra.mxu0 0.0
        %1519 = vmatprep.subr.mxu0 0.0
        %1520 = vmatpush1.msra.mxu0 0.0
        %1521 = vmatprep.subr.mxu0 0.0
        %1522 = vmatpush1.msra.mxu0 0.0
        %1523 = vmatprep.subr.mxu0 0.0
        %1524 = vmatpush1.msra.mxu0 0.0
        %1525 = vmatprep.subr.mxu0 0.0
        %1526 = vmatpush1.msra.mxu0 0.0
        %1527 = vmatprep.subr.mxu0 0.0
        %1528 = vmatpush1.msra.mxu0 0.0
        %1529 = vmatprep.subr.mxu0 0.0
        %1530 = vmatpush1.msra.mxu0 0.0
        %1531 = vmatprep.subr.mxu0 0.0
        %1532 = vmatpush1.msra.mxu0 0.0
        %1533 = vmatprep.subr.mxu0 0.0
        %1534 = vmatpush1.msra.mxu0 0.0
        %1535 = vmatprep.subr.mxu0 0.0
        %1536 = vmatpush1.msra.mxu0 0.0
        %1537 = vmatprep.subr.mxu0 0.0
        %1538 = vmatpush1.msra.mxu0 0.0
        %1539 = vmatprep.subr.mxu0 0.0
        %1540 = vmatpush1.msra.mxu0 0.0
        %1541 = vmatprep.subr.mxu0 0.0
        %1542 = vmatpush1.msra.mxu0 0.0
        %1543 = vmatprep.subr.mxu0 0.0
        %1544 = vmatpush1.msra.mxu0 0.0
        %1545 = vmatprep.subr.mxu0 0.0
        %1546 = vmatpush1.msra.mxu0 0.0
        %1547 = vmatprep.subr.mxu0 0.0
        %1548 = vmatpush1.msra.mxu0 0.0
        %1549 = vmatprep.subr.mxu0 0.0
        %1550 = vmatpush1.msra.mxu0 0.0
        %1551 = vmatprep.subr.mxu0 0.0
        %1552 = vmatpush1.msra.mxu0 0.0
        %1553 = vmatprep.subr.mxu0 0.0
        %1554 = vmatpush1.msra.mxu0 0.0
        %1555 = vmatprep.subr.mxu0 0.0
        %1556 = vmatpush1.msra.mxu0 0.0
        %1557 = vmatprep.subr.mxu0 0.0
        %1558 = vmatpush1.msra.mxu0 0.0
        %1559 = vmatprep.subr.mxu0 0.0
        %1560 = vmatpush1.msra.mxu0 0.0
        %1561 = vmatprep.subr.mxu0 0.0
        %1562 = vmatpush1.msra.mxu0 0.0
        %1563 = vmatprep.subr.mxu0 0.0
        %1564 = vmatpush1.msra.mxu0 0.0
        %1565 = vmatprep.subr.mxu0 0.0
        %1566 = vmatpush1.msra.mxu0 0.0
        %1567 = vmatprep.subr.mxu0 0.0
        %1568 = vmatpush1.msra.mxu0 0.0
        %1569 = vmatprep.subr.mxu0 0.0
        %1570 = vmatpush1.msra.mxu0 0.0
        %1571 = vmatprep.subr.mxu0 0.0
        %1572 = vmatpush1.msra.mxu0 0.0
        %1573 = vmatprep.mubr.f32.mxu0 0.0
        %v1574 = vand.u32 %v1350, 4294901760
        %v1575 = vsub.f32 %v1350, %v1574
        %1576 = vmatmul.mubr.f32.gmra.mrb[0].mxu0 %v1575
        %v1577 = vpop.f32.mrb[0].mxu0
        %v1578 = vadd.f32 %v1504, %v1577
        %v1579 = vpop.f32.mrb[0].mxu0
        %1580 = vdwg.mxu0
        %1581 = vmatprep.subr.mxu0 0.0
        %v1582 = vand.u32 %v1353, 4294901760
        %1583 = vmatpush1.msra.mxu0 %v1582
        %1584 = vmatprep.subr.mxu0 0.0
        %1585 = vmatpush1.msra.mxu0 0.0
        %1586 = vmatprep.subr.mxu0 0.0
        %1587 = vmatpush1.msra.mxu0 0.0
        %1588 = vmatprep.subr.mxu0 0.0
        %1589 = vmatpush1.msra.mxu0 0.0
        %1590 = vmatprep.subr.mxu0 0.0
        %1591 = vmatpush1.msra.mxu0 0.0
        %1592 = vmatprep.subr.mxu0 0.0
        %1593 = vmatpush1.msra.mxu0 0.0
        %1594 = vmatprep.subr.mxu0 0.0
        %1595 = vmatpush1.msra.mxu0 0.0
        %1596 = vmatprep.subr.mxu0 0.0
        %1597 = vmatpush1.msra.mxu0 0.0
        %1598 = vmatprep.subr.mxu0 0.0
        %1599 = vmatpush1.msra.mxu0 0.0
        %1600 = vmatprep.subr.mxu0 0.0
        %1601 = vmatpush1.msra.mxu0 0.0
        %1602 = vmatprep.subr.mxu0 0.0
        %1603 = vmatpush1.msra.mxu0 0.0
        %1604 = vmatprep.subr.mxu0 0.0
        %1605 = vmatpush1.msra.mxu0 0.0
        %1606 = vmatprep.subr.mxu0 0.0
        %1607 = vmatpush1.msra.mxu0 0.0
        %1608 = vmatprep.subr.mxu0 0.0
        %1609 = vmatpush1.msra.mxu0 0.0
        %1610 = vmatprep.subr.mxu0 0.0
        %1611 = vmatpush1.msra.mxu0 0.0
        %1612 = vmatprep.subr.mxu0 0.0
        %1613 = vmatpush1.msra.mxu0 0.0
        %1614 = vmatprep.subr.mxu0 0.0
        %1615 = vmatpush1.msra.mxu0 0.0
        %1616 = vmatprep.subr.mxu0 0.0
        %1617 = vmatpush1.msra.mxu0 0.0
        %1618 = vmatprep.subr.mxu0 0.0
        %1619 = vmatpush1.msra.mxu0 0.0
        %1620 = vmatprep.subr.mxu0 0.0
        %1621 = vmatpush1.msra.mxu0 0.0
        %1622 = vmatprep.subr.mxu0 0.0
        %1623 = vmatpush1.msra.mxu0 0.0
        %1624 = vmatprep.subr.mxu0 0.0
        %1625 = vmatpush1.msra.mxu0 0.0
        %1626 = vmatprep.subr.mxu0 0.0
        %1627 = vmatpush1.msra.mxu0 0.0
        %1628 = vmatprep.subr.mxu0 0.0
        %1629 = vmatpush1.msra.mxu0 0.0
        %1630 = vmatprep.subr.mxu0 0.0
        %1631 = vmatpush1.msra.mxu0 0.0
        %1632 = vmatprep.subr.mxu0 0.0
        %1633 = vmatpush1.msra.mxu0 0.0
        %1634 = vmatprep.subr.mxu0 0.0
        %1635 = vmatpush1.msra.mxu0 0.0
        %1636 = vmatprep.subr.mxu0 0.0
        %1637 = vmatpush1.msra.mxu0 0.0
        %1638 = vmatprep.subr.mxu0 0.0
        %1639 = vmatpush1.msra.mxu0 0.0
        %1640 = vmatprep.subr.mxu0 0.0
        %1641 = vmatpush1.msra.mxu0 0.0
        %1642 = vmatprep.subr.mxu0 0.0
        %1643 = vmatpush1.msra.mxu0 0.0
        %1644 = vmatprep.subr.mxu0 0.0
        %1645 = vmatpush1.msra.mxu0 0.0
        %1646 = vmatprep.mubr.f32.mxu0 0.0
        %v1647 = vand.u32 %v1350, 4294901760
        %v1648 = vsub.f32 %v1350, %v1647
        %v1649 = vand.u32 %v1648, 4294901760
        %1650 = vmatmul.mubr.f32.gmra.mrb[0].mxu0 %v1649
        %v1651 = vpop.f32.mrb[0].mxu0
        %v1652 = vadd.f32 %v1578, %v1651
        %v1653 = vpop.f32.mrb[0].mxu0
        %1654 = vdwg.mxu0
        %1655 = vmatprep.subr.mxu0 0.0
        %v1656 = vand.u32 %v1353, 4294901760
        %v1657 = vsub.f32 %v1353, %v1656
        %v1658 = vand.u32 %v1657, 4294901760
        %1659 = vmatpush1.msra.mxu0 %v1658
        %1660 = vmatprep.subr.mxu0 0.0
        %1661 = vmatpush1.msra.mxu0 0.0
        %1662 = vmatprep.subr.mxu0 0.0
        %1663 = vmatpush1.msra.mxu0 0.0
        %1664 = vmatprep.subr.mxu0 0.0
        %1665 = vmatpush1.msra.mxu0 0.0
        %1666 = vmatprep.subr.mxu0 0.0
        %1667 = vmatpush1.msra.mxu0 0.0
        %1668 = vmatprep.subr.mxu0 0.0
        %1669 = vmatpush1.msra.mxu0 0.0
        %1670 = vmatprep.subr.mxu0 0.0
        %1671 = vmatpush1.msra.mxu0 0.0
        %1672 = vmatprep.subr.mxu0 0.0
        %1673 = vmatpush1.msra.mxu0 0.0
        %1674 = vmatprep.subr.mxu0 0.0
        %1675 = vmatpush1.msra.mxu0 0.0
        %1676 = vmatprep.subr.mxu0 0.0
        %1677 = vmatpush1.msra.mxu0 0.0
        %1678 = vmatprep.subr.mxu0 0.0
        %1679 = vmatpush1.msra.mxu0 0.0
        %1680 = vmatprep.subr.mxu0 0.0
        %1681 = vmatpush1.msra.mxu0 0.0
        %1682 = vmatprep.subr.mxu0 0.0
        %1683 = vmatpush1.msra.mxu0 0.0
        %1684 = vmatprep.subr.mxu0 0.0
        %1685 = vmatpush1.msra.mxu0 0.0
        %1686 = vmatprep.subr.mxu0 0.0
        %1687 = vmatpush1.msra.mxu0 0.0
        %1688 = vmatprep.subr.mxu0 0.0
        %1689 = vmatpush1.msra.mxu0 0.0
        %1690 = vmatprep.subr.mxu0 0.0
        %1691 = vmatpush1.msra.mxu0 0.0
        %1692 = vmatprep.subr.mxu0 0.0
        %1693 = vmatpush1.msra.mxu0 0.0
        %1694 = vmatprep.subr.mxu0 0.0
        %1695 = vmatpush1.msra.mxu0 0.0
        %1696 = vmatprep.subr.mxu0 0.0
        %1697 = vmatpush1.msra.mxu0 0.0
        %1698 = vmatprep.subr.mxu0 0.0
        %1699 = vmatpush1.msra.mxu0 0.0
        %1700 = vmatprep.subr.mxu0 0.0
        %1701 = vmatpush1.msra.mxu0 0.0
        %1702 = vmatprep.subr.mxu0 0.0
        %1703 = vmatpush1.msra.mxu0 0.0
        %1704 = vmatprep.subr.mxu0 0.0
        %1705 = vmatpush1.msra.mxu0 0.0
        %1706 = vmatprep.subr.mxu0 0.0
        %1707 = vmatpush1.msra.mxu0 0.0
        %1708 = vmatprep.subr.mxu0 0.0
        %1709 = vmatpush1.msra.mxu0 0.0
        %1710 = vmatprep.subr.mxu0 0.0
        %1711 = vmatpush1.msra.mxu0 0.0
        %1712 = vmatprep.subr.mxu0 0.0
        %1713 = vmatpush1.msra.mxu0 0.0
        %1714 = vmatprep.subr.mxu0 0.0
        %1715 = vmatpush1.msra.mxu0 0.0
        %1716 = vmatprep.subr.mxu0 0.0
        %1717 = vmatpush1.msra.mxu0 0.0
        %1718 = vmatprep.subr.mxu0 0.0
        %1719 = vmatpush1.msra.mxu0 0.0
        %1720 = vmatprep.subr.mxu0 0.0
        %1721 = vmatpush1.msra.mxu0 0.0
        %1722 = vmatprep.mubr.f32.mxu0 0.0
        %v1723 = vand.u32 %v1350, 4294901760
        %1724 = vmatmul.mubr.f32.gmra.mrb[0].mxu0 %v1723
        %v1725 = vpop.f32.mrb[0].mxu0
        %v1726 = vadd.f32 %v1652, %v1725
        %v1727 = vpop.f32.mrb[0].mxu0
        %1728 = vdwg.mxu0
        %1729 = vmatprep.subr.mxu0 0.0
        %v1730 = vand.u32 %v1353, 4294901760
        %1731 = vmatpush1.msra.mxu0 %v1730
        %1732 = vmatprep.subr.mxu0 0.0
        %1733 = vmatpush1.msra.mxu0 0.0
        %1734 = vmatprep.subr.mxu0 0.0
        %1735 = vmatpush1.msra.mxu0 0.0
        %1736 = vmatprep.subr.mxu0 0.0
        %1737 = vmatpush1.msra.mxu0 0.0
        %1738 = vmatprep.subr.mxu0 0.0
        %1739 = vmatpush1.msra.mxu0 0.0
        %1740 = vmatprep.subr.mxu0 0.0
        %1741 = vmatpush1.msra.mxu0 0.0
        %1742 = vmatprep.subr.mxu0 0.0
        %1743 = vmatpush1.msra.mxu0 0.0
        %1744 = vmatprep.subr.mxu0 0.0
        %1745 = vmatpush1.msra.mxu0 0.0
        %1746 = vmatprep.subr.mxu0 0.0
        %1747 = vmatpush1.msra.mxu0 0.0
        %1748 = vmatprep.subr.mxu0 0.0
        %1749 = vmatpush1.msra.mxu0 0.0
        %1750 = vmatprep.subr.mxu0 0.0
        %1751 = vmatpush1.msra.mxu0 0.0
        %1752 = vmatprep.subr.mxu0 0.0
        %1753 = vmatpush1.msra.mxu0 0.0
        %1754 = vmatprep.subr.mxu0 0.0
        %1755 = vmatpush1.msra.mxu0 0.0
        %1756 = vmatprep.subr.mxu0 0.0
        %1757 = vmatpush1.msra.mxu0 0.0
        %1758 = vmatprep.subr.mxu0 0.0
        %1759 = vmatpush1.msra.mxu0 0.0
        %1760 = vmatprep.subr.mxu0 0.0
        %1761 = vmatpush1.msra.mxu0 0.0
        %1762 = vmatprep.subr.mxu0 0.0
        %1763 = vmatpush1.msra.mxu0 0.0
        %1764 = vmatprep.subr.mxu0 0.0
        %1765 = vmatpush1.msra.mxu0 0.0
        %1766 = vmatprep.subr.mxu0 0.0
        %1767 = vmatpush1.msra.mxu0 0.0
        %1768 = vmatprep.subr.mxu0 0.0
        %1769 = vmatpush1.msra.mxu0 0.0
        %1770 = vmatprep.subr.mxu0 0.0
        %1771 = vmatpush1.msra.mxu0 0.0
        %1772 = vmatprep.subr.mxu0 0.0
        %1773 = vmatpush1.msra.mxu0 0.0
        %1774 = vmatprep.subr.mxu0 0.0
        %1775 = vmatpush1.msra.mxu0 0.0
        %1776 = vmatprep.subr.mxu0 0.0
        %1777 = vmatpush1.msra.mxu0 0.0
        %1778 = vmatprep.subr.mxu0 0.0
        %1779 = vmatpush1.msra.mxu0 0.0
        %1780 = vmatprep.subr.mxu0 0.0
        %1781 = vmatpush1.msra.mxu0 0.0
        %1782 = vmatprep.subr.mxu0 0.0
        %1783 = vmatpush1.msra.mxu0 0.0
        %1784 = vmatprep.subr.mxu0 0.0
        %1785 = vmatpush1.msra.mxu0 0.0
        %1786 = vmatprep.subr.mxu0 0.0
        %1787 = vmatpush1.msra.mxu0 0.0
        %1788 = vmatprep.subr.mxu0 0.0
        %1789 = vmatpush1.msra.mxu0 0.0
        %1790 = vmatprep.subr.mxu0 0.0
        %1791 = vmatpush1.msra.mxu0 0.0
        %1792 = vmatprep.subr.mxu0 0.0
        %1793 = vmatpush1.msra.mxu0 0.0
        %1794 = vmatprep.mubr.f32.mxu0 0.0
        %v1795 = vand.u32 %v1350, 4294901760
        %1796 = vmatmul.mubr.f32.gmra.mrb[0].mxu0 %v1795
        %v1797 = vpop.f32.mrb[0].mxu0
        %v1798 = vadd.f32 %v1726, %v1797
        %v1799 = vpop.f32.mrb[0].mxu0
        %1800 = vdwg.mxu0
        %v1801 = vadd.f32 %v1344, %v1798
        %v1802 = vld [vmem:[%s4] sm:$0xf]
        %1804 = vset.pattern.permute.xlu0 0
        %1805 = vperm.xlu0 %1804, %v1802
        %v1806 = vpop.permute.xlu0 %1805
        %v1808 = vadd.f32 %v1801, %v1806
        %v1809 = vmax.f32 %v1808, 0.0
        %v1810 = vld [vmem:[%s5] sm:$0xf]
        %v1811 = vld [vmem:[%s6] sm:$0xf]
        %1813 = vset.pattern.permute.xlu0 0
        %1814 = vperm.xlu0 %1813, %v1811
        %v1815 = vpop.permute.xlu0 %1814
        %v1818 = vsel %vm442, %v1810, 0
        %v1821 = vsel %vm446, %v1809, 0
        %1823 = vmatprep.subr.mxu0 0.0
        %v1824 = vand.u32 %v1821, 4294901760
        %1825 = vmatpush1.msra.mxu0 %v1824
        %1826 = vmatprep.subr.mxu0 0.0
        %1827 = vmatpush1.msra.mxu0 0.0
        %1828 = vmatprep.subr.mxu0 0.0
        %1829 = vmatpush1.msra.mxu0 0.0
        %1830 = vmatprep.subr.mxu0 0.0
        %1831 = vmatpush1.msra.mxu0 0.0
        %1832 = vmatprep.subr.mxu0 0.0
        %1833 = vmatpush1.msra.mxu0 0.0
        %1834 = vmatprep.subr.mxu0 0.0
        %1835 = vmatpush1.msra.mxu0 0.0
        %1836 = vmatprep.subr.mxu0 0.0
        %1837 = vmatpush1.msra.mxu0 0.0
        %1838 = vmatprep.subr.mxu0 0.0
        %1839 = vmatpush1.msra.mxu0 0.0
        %1840 = vmatprep.subr.mxu0 0.0
        %1841 = vmatpush1.msra.mxu0 0.0
        %1842 = vmatprep.subr.mxu0 0.0
        %1843 = vmatpush1.msra.mxu0 0.0
        %1844 = vmatprep.subr.mxu0 0.0
        %1845 = vmatpush1.msra.mxu0 0.0
        %1846 = vmatprep.subr.mxu0 0.0
        %1847 = vmatpush1.msra.mxu0 0.0
        %1848 = vmatprep.subr.mxu0 0.0
        %1849 = vmatpush1.msra.mxu0 0.0
        %1850 = vmatprep.subr.mxu0 0.0
        %1851 = vmatpush1.msra.mxu0 0.0
        %1852 = vmatprep.subr.mxu0 0.0
        %1853 = vmatpush1.msra.mxu0 0.0
        %1854 = vmatprep.subr.mxu0 0.0
        %1855 = vmatpush1.msra.mxu0 0.0
        %1856 = vmatprep.subr.mxu0 0.0
        %1857 = vmatpush1.msra.mxu0 0.0
        %1858 = vmatprep.subr.mxu0 0.0
        %1859 = vmatpush1.msra.mxu0 0.0
        %1860 = vmatprep.subr.mxu0 0.0
        %1861 = vmatpush1.msra.mxu0 0.0
        %1862 = vmatprep.subr.mxu0 0.0
        %1863 = vmatpush1.msra.mxu0 0.0
        %1864 = vmatprep.subr.mxu0 0.0
        %1865 = vmatpush1.msra.mxu0 0.0
        %1866 = vmatprep.subr.mxu0 0.0
        %1867 = vmatpush1.msra.mxu0 0.0
        %1868 = vmatprep.subr.mxu0 0.0
        %1869 = vmatpush1.msra.mxu0 0.0
        %1870 = vmatprep.subr.mxu0 0.0
        %1871 = vmatpush1.msra.mxu0 0.0
        %1872 = vmatprep.subr.mxu0 0.0
        %1873 = vmatpush1.msra.mxu0 0.0
        %1874 = vmatprep.subr.mxu0 0.0
        %1875 = vmatpush1.msra.mxu0 0.0
        %1876 = vmatprep.subr.mxu0 0.0
        %1877 = vmatpush1.msra.mxu0 0.0
        %1878 = vmatprep.subr.mxu0 0.0
        %1879 = vmatpush1.msra.mxu0 0.0
        %1880 = vmatprep.subr.mxu0 0.0
        %1881 = vmatpush1.msra.mxu0 0.0
        %1882 = vmatprep.subr.mxu0 0.0
        %1883 = vmatpush1.msra.mxu0 0.0
        %1884 = vmatprep.subr.mxu0 0.0
        %1885 = vmatpush1.msra.mxu0 0.0
        %1886 = vmatprep.subr.mxu0 0.0
        %1887 = vmatpush1.msra.mxu0 0.0
        %1888 = vmatprep.mubr.f32.mxu0 0.0
        %v1889 = vand.u32 %v1818, 4294901760
        %v1890 = vsub.f32 %v1818, %v1889
        %v1891 = vand.u32 %v1890, 4294901760
        %v1892 = vsub.f32 %v1890, %v1891
        %v1893 = vand.u32 %v1892, 4294901760
        %1894 = vmatmul.mubr.f32.gmra.mrb[0].mxu0 %v1893
        %v1895 = vpop.f32.mrb[0].mxu0
        %v1896 = vadd.f32 %v1815, %v1895
        %v1897 = vpop.f32.mrb[0].mxu0
        %1898 = vdwg.mxu0
        %1899 = vmatprep.subr.mxu0 0.0
        %v1900 = vand.u32 %v1821, 4294901760
        %v1901 = vsub.f32 %v1821, %v1900
        %v1902 = vand.u32 %v1901, 4294901760
        %v1903 = vsub.f32 %v1901, %v1902
        %v1904 = vand.u32 %v1903, 4294901760
        %1905 = vmatpush1.msra.mxu0 %v1904
        %1906 = vmatprep.subr.mxu0 0.0
        %1907 = vmatpush1.msra.mxu0 0.0
        %1908 = vmatprep.subr.mxu0 0.0
        %1909 = vmatpush1.msra.mxu0 0.0
        %1910 = vmatprep.subr.mxu0 0.0
        %1911 = vmatpush1.msra.mxu0 0.0
        %1912 = vmatprep.subr.mxu0 0.0
        %1913 = vmatpush1.msra.mxu0 0.0
        %1914 = vmatprep.subr.mxu0 0.0
        %1915 = vmatpush1.msra.mxu0 0.0
        %1916 = vmatprep.subr.mxu0 0.0
        %1917 = vmatpush1.msra.mxu0 0.0
        %1918 = vmatprep.subr.mxu0 0.0
        %1919 = vmatpush1.msra.mxu0 0.0
        %1920 = vmatprep.subr.mxu0 0.0
        %1921 = vmatpush1.msra.mxu0 0.0
        %1922 = vmatprep.subr.mxu0 0.0
        %1923 = vmatpush1.msra.mxu0 0.0
        %1924 = vmatprep.subr.mxu0 0.0
        %1925 = vmatpush1.msra.mxu0 0.0
        %1926 = vmatprep.subr.mxu0 0.0
        %1927 = vmatpush1.msra.mxu0 0.0
        %1928 = vmatprep.subr.mxu0 0.0
        %1929 = vmatpush1.msra.mxu0 0.0
        %1930 = vmatprep.subr.mxu0 0.0
        %1931 = vmatpush1.msra.mxu0 0.0
        %1932 = vmatprep.subr.mxu0 0.0
        %1933 = vmatpush1.msra.mxu0 0.0
        %1934 = vmatprep.subr.mxu0 0.0
        %1935 = vmatpush1.msra.mxu0 0.0
        %1936 = vmatprep.subr.mxu0 0.0
        %1937 = vmatpush1.msra.mxu0 0.0
        %1938 = vmatprep.subr.mxu0 0.0
        %1939 = vmatpush1.msra.mxu0 0.0
        %1940 = vmatprep.subr.mxu0 0.0
        %1941 = vmatpush1.msra.mxu0 0.0
        %1942 = vmatprep.subr.mxu0 0.0
        %1943 = vmatpush1.msra.mxu0 0.0
        %1944 = vmatprep.subr.mxu0 0.0
        %1945 = vmatpush1.msra.mxu0 0.0
        %1946 = vmatprep.subr.mxu0 0.0
        %1947 = vmatpush1.msra.mxu0 0.0
        %1948 = vmatprep.subr.mxu0 0.0
        %1949 = vmatpush1.msra.mxu0 0.0
        %1950 = vmatprep.subr.mxu0 0.0
        %1951 = vmatpush1.msra.mxu0 0.0
        %1952 = vmatprep.subr.mxu0 0.0
        %1953 = vmatpush1.msra.mxu0 0.0
        %1954 = vmatprep.subr.mxu0 0.0
        %1955 = vmatpush1.msra.mxu0 0.0
        %1956 = vmatprep.subr.mxu0 0.0
        %1957 = vmatpush1.msra.mxu0 0.0
        %1958 = vmatprep.subr.mxu0 0.0
        %1959 = vmatpush1.msra.mxu0 0.0
        %1960 = vmatprep.subr.mxu0 0.0
        %1961 = vmatpush1.msra.mxu0 0.0
        %1962 = vmatprep.subr.mxu0 0.0
        %1963 = vmatpush1.msra.mxu0 0.0
        %1964 = vmatprep.subr.mxu0 0.0
        %1965 = vmatpush1.msra.mxu0 0.0
        %1966 = vmatprep.subr.mxu0 0.0
        %1967 = vmatpush1.msra.mxu0 0.0
        %1968 = vmatprep.mubr.f32.mxu0 0.0
        %v1969 = vand.u32 %v1818, 4294901760
        %1970 = vmatmul.mubr.f32.gmra.mrb[0].mxu0 %v1969
        %v1971 = vpop.f32.mrb[0].mxu0
        %v1972 = vadd.f32 %v1896, %v1971
        %v1973 = vpop.f32.mrb[0].mxu0
        %1974 = vdwg.mxu0
        %1975 = vmatprep.subr.mxu0 0.0
        %v1976 = vand.u32 %v1821, 4294901760
        %v1977 = vsub.f32 %v1821, %v1976
        %1978 = vmatpush1.msra.mxu0 %v1977
        %1979 = vmatprep.subr.mxu0 0.0
        %1980 = vmatpush1.msra.mxu0 0.0
        %1981 = vmatprep.subr.mxu0 0.0
        %1982 = vmatpush1.msra.mxu0 0.0
        %1983 = vmatprep.subr.mxu0 0.0
        %1984 = vmatpush1.msra.mxu0 0.0
        %1985 = vmatprep.subr.mxu0 0.0
        %1986 = vmatpush1.msra.mxu0 0.0
        %1987 = vmatprep.subr.mxu0 0.0
        %1988 = vmatpush1.msra.mxu0 0.0
        %1989 = vmatprep.subr.mxu0 0.0
        %1990 = vmatpush1.msra.mxu0 0.0
        %1991 = vmatprep.subr.mxu0 0.0
        %1992 = vmatpush1.msra.mxu0 0.0
        %1993 = vmatprep.subr.mxu0 0.0
        %1994 = vmatpush1.msra.mxu0 0.0
        %1995 = vmatprep.subr.mxu0 0.0
        %1996 = vmatpush1.msra.mxu0 0.0
        %1997 = vmatprep.subr.mxu0 0.0
        %1998 = vmatpush1.msra.mxu0 0.0
        %1999 = vmatprep.subr.mxu0 0.0
        %2000 = vmatpush1.msra.mxu0 0.0
        %2001 = vmatprep.subr.mxu0 0.0
        %2002 = vmatpush1.msra.mxu0 0.0
        %2003 = vmatprep.subr.mxu0 0.0
        %2004 = vmatpush1.msra.mxu0 0.0
        %2005 = vmatprep.subr.mxu0 0.0
        %2006 = vmatpush1.msra.mxu0 0.0
        %2007 = vmatprep.subr.mxu0 0.0
        %2008 = vmatpush1.msra.mxu0 0.0
        %2009 = vmatprep.subr.mxu0 0.0
        %2010 = vmatpush1.msra.mxu0 0.0
        %2011 = vmatprep.subr.mxu0 0.0
        %2012 = vmatpush1.msra.mxu0 0.0
        %2013 = vmatprep.subr.mxu0 0.0
        %2014 = vmatpush1.msra.mxu0 0.0
        %2015 = vmatprep.subr.mxu0 0.0
        %2016 = vmatpush1.msra.mxu0 0.0
        %2017 = vmatprep.subr.mxu0 0.0
        %2018 = vmatpush1.msra.mxu0 0.0
        %2019 = vmatprep.subr.mxu0 0.0
        %2020 = vmatpush1.msra.mxu0 0.0
        %2021 = vmatprep.subr.mxu0 0.0
        %2022 = vmatpush1.msra.mxu0 0.0
        %2023 = vmatprep.subr.mxu0 0.0
        %2024 = vmatpush1.msra.mxu0 0.0
        %2025 = vmatprep.subr.mxu0 0.0
        %2026 = vmatpush1.msra.mxu0 0.0
        %2027 = vmatprep.subr.mxu0 0.0
        %2028 = vmatpush1.msra.mxu0 0.0
        %2029 = vmatprep.subr.mxu0 0.0
        %2030 = vmatpush1.msra.mxu0 0.0
        %2031 = vmatprep.subr.mxu0 0.0
        %2032 = vmatpush1.msra.mxu0 0.0
        %2033 = vmatprep.subr.mxu0 0.0
        %2034 = vmatpush1.msra.mxu0 0.0
        %2035 = vmatprep.subr.mxu0 0.0
        %2036 = vmatpush1.msra.mxu0 0.0
        %2037 = vmatprep.subr.mxu0 0.0
        %2038 = vmatpush1.msra.mxu0 0.0
        %2039 = vmatprep.subr.mxu0 0.0
        %2040 = vmatpush1.msra.mxu0 0.0
        %2041 = vmatprep.mubr.f32.mxu0 0.0
        %v2042 = vand.u32 %v1818, 4294901760
        %v2043 = vsub.f32 %v1818, %v2042
        %2044 = vmatmul.mubr.f32.gmra.mrb[0].mxu0 %v2043
        %v2045 = vpop.f32.mrb[0].mxu0
        %v2046 = vadd.f32 %v1972, %v2045
        %v2047 = vpop.f32.mrb[0].mxu0
        %2048 = vdwg.mxu0
        %2049 = vmatprep.subr.mxu0 0.0
        %v2050 = vand.u32 %v1821, 4294901760
        %2051 = vmatpush1.msra.mxu0 %v2050
        %2052 = vmatprep.subr.mxu0 0.0
        %2053 = vmatpush1.msra.mxu0 0.0
        %2054 = vmatprep.subr.mxu0 0.0
        %2055 = vmatpush1.msra.mxu0 0.0
        %2056 = vmatprep.subr.mxu0 0.0
        %2057 = vmatpush1.msra.mxu0 0.0
        %2058 = vmatprep.subr.mxu0 0.0
        %2059 = vmatpush1.msra.mxu0 0.0
        %2060 = vmatprep.subr.mxu0 0.0
        %2061 = vmatpush1.msra.mxu0 0.0
        %2062 = vmatprep.subr.mxu0 0.0
        %2063 = vmatpush1.msra.mxu0 0.0
        %2064 = vmatprep.subr.mxu0 0.0
        %2065 = vmatpush1.msra.mxu0 0.0
        %2066 = vmatprep.subr.mxu0 0.0
        %2067 = vmatpush1.msra.mxu0 0.0
        %2068 = vmatprep.subr.mxu0 0.0
        %2069 = vmatpush1.msra.mxu0 0.0
        %2070 = vmatprep.subr.mxu0 0.0
        %2071 = vmatpush1.msra.mxu0 0.0
        %2072 = vmatprep.subr.mxu0 0.0
        %2073 = vmatpush1.msra.mxu0 0.0
        %2074 = vmatprep.subr.mxu0 0.0
        %2075 = vmatpush1.msra.mxu0 0.0
        %2076 = vmatprep.subr.mxu0 0.0
        %2077 = vmatpush1.msra.mxu0 0.0
        %2078 = vmatprep.subr.mxu0 0.0
        %2079 = vmatpush1.msra.mxu0 0.0
        %2080 = vmatprep.subr.mxu0 0.0
        %2081 = vmatpush1.msra.mxu0 0.0
        %2082 = vmatprep.subr.mxu0 0.0
        %2083 = vmatpush1.msra.mxu0 0.0
        %2084 = vmatprep.subr.mxu0 0.0
        %2085 = vmatpush1.msra.mxu0 0.0
        %2086 = vmatprep.subr.mxu0 0.0
        %2087 = vmatpush1.msra.mxu0 0.0
        %2088 = vmatprep.subr.mxu0 0.0
        %2089 = vmatpush1.msra.mxu0 0.0
        %2090 = vmatprep.subr.mxu0 0.0
        %2091 = vmatpush1.msra.mxu0 0.0
        %2092 = vmatprep.subr.mxu0 0.0
        %2093 = vmatpush1.msra.mxu0 0.0
        %2094 = vmatprep.subr.mxu0 0.0
        %2095 = vmatpush1.msra.mxu0 0.0
        %2096 = vmatprep.subr.mxu0 0.0
        %2097 = vmatpush1.msra.mxu0 0.0
        %2098 = vmatprep.subr.mxu0 0.0
        %2099 = vmatpush1.msra.mxu0 0.0
        %2100 = vmatprep.subr.mxu0 0.0
        %2101 = vmatpush1.msra.mxu0 0.0
        %2102 = vmatprep.subr.mxu0 0.0
        %2103 = vmatpush1.msra.mxu0 0.0
        %2104 = vmatprep.subr.mxu0 0.0
        %2105 = vmatpush1.msra.mxu0 0.0
        %2106 = vmatprep.subr.mxu0 0.0
        %2107 = vmatpush1.msra.mxu0 0.0
        %2108 = vmatprep.subr.mxu0 0.0
        %2109 = vmatpush1.msra.mxu0 0.0
        %2110 = vmatprep.subr.mxu0 0.0
        %2111 = vmatpush1.msra.mxu0 0.0
        %2112 = vmatprep.subr.mxu0 0.0
        %2113 = vmatpush1.msra.mxu0 0.0
        %2114 = vmatprep.mubr.f32.mxu0 0.0
        %v2115 = vand.u32 %v1818, 4294901760
        %v2116 = vsub.f32 %v1818, %v2115
        %v2117 = vand.u32 %v2116, 4294901760
        %2118 = vmatmul.mubr.f32.gmra.mrb[0].mxu0 %v2117
        %v2119 = vpop.f32.mrb[0].mxu0
        %v2120 = vadd.f32 %v2046, %v2119
        %v2121 = vpop.f32.mrb[0].mxu0
        %2122 = vdwg.mxu0
        %2123 = vmatprep.subr.mxu0 0.0
        %v2124 = vand.u32 %v1821, 4294901760
        %v2125 = vsub.f32 %v1821, %v2124
        %v2126 = vand.u32 %v2125, 4294901760
        %2127 = vmatpush1.msra.mxu0 %v2126
        %2128 = vmatprep.subr.mxu0 0.0
        %2129 = vmatpush1.msra.mxu0 0.0
        %2130 = vmatprep.subr.mxu0 0.0
        %2131 = vmatpush1.msra.mxu0 0.0
        %2132 = vmatprep.subr.mxu0 0.0
        %2133 = vmatpush1.msra.mxu0 0.0
        %2134 = vmatprep.subr.mxu0 0.0
        %2135 = vmatpush1.msra.mxu0 0.0
        %2136 = vmatprep.subr.mxu0 0.0
        %2137 = vmatpush1.msra.mxu0 0.0
        %2138 = vmatprep.subr.mxu0 0.0
        %2139 = vmatpush1.msra.mxu0 0.0
        %2140 = vmatprep.subr.mxu0 0.0
        %2141 = vmatpush1.msra.mxu0 0.0
        %2142 = vmatprep.subr.mxu0 0.0
        %2143 = vmatpush1.msra.mxu0 0.0
        %2144 = vmatprep.subr.mxu0 0.0
        %2145 = vmatpush1.msra.mxu0 0.0
        %2146 = vmatprep.subr.mxu0 0.0
        %2147 = vmatpush1.msra.mxu0 0.0
        %2148 = vmatprep.subr.mxu0 0.0
        %2149 = vmatpush1.msra.mxu0 0.0
        %2150 = vmatprep.subr.mxu0 0.0
        %2151 = vmatpush1.msra.mxu0 0.0
        %2152 = vmatprep.subr.mxu0 0.0
        %2153 = vmatpush1.msra.mxu0 0.0
        %2154 = vmatprep.subr.mxu0 0.0
        %2155 = vmatpush1.msra.mxu0 0.0
        %2156 = vmatprep.subr.mxu0 0.0
        %2157 = vmatpush1.msra.mxu0 0.0
        %2158 = vmatprep.subr.mxu0 0.0
        %2159 = vmatpush1.msra.mxu0 0.0
        %2160 = vmatprep.subr.mxu0 0.0
        %2161 = vmatpush1.msra.mxu0 0.0
        %2162 = vmatprep.subr.mxu0 0.0
        %2163 = vmatpush1.msra.mxu0 0.0
        %2164 = vmatprep.subr.mxu0 0.0
        %2165 = vmatpush1.msra.mxu0 0.0
        %2166 = vmatprep.subr.mxu0 0.0
        %2167 = vmatpush1.msra.mxu0 0.0
        %2168 = vmatprep.subr.mxu0 0.0
        %2169 = vmatpush1.msra.mxu0 0.0
        %2170 = vmatprep.subr.mxu0 0.0
        %2171 = vmatpush1.msra.mxu0 0.0
        %2172 = vmatprep.subr.mxu0 0.0
        %2173 = vmatpush1.msra.mxu0 0.0
        %2174 = vmatprep.subr.mxu0 0.0
        %2175 = vmatpush1.msra.mxu0 0.0
        %2176 = vmatprep.subr.mxu0 0.0
        %2177 = vmatpush1.msra.mxu0 0.0
        %2178 = vmatprep.subr.mxu0 0.0
        %2179 = vmatpush1.msra.mxu0 0.0
        %2180 = vmatprep.subr.mxu0 0.0
        %2181 = vmatpush1.msra.mxu0 0.0
        %2182 = vmatprep.subr.mxu0 0.0
        %2183 = vmatpush1.msra.mxu0 0.0
        %2184 = vmatprep.subr.mxu0 0.0
        %2185 = vmatpush1.msra.mxu0 0.0
        %2186 = vmatprep.subr.mxu0 0.0
        %2187 = vmatpush1.msra.mxu0 0.0
        %2188 = vmatprep.subr.mxu0 0.0
        %2189 = vmatpush1.msra.mxu0 0.0
        %2190 = vmatprep.mubr.f32.mxu0 0.0
        %v2191 = vand.u32 %v1818, 4294901760
        %2192 = vmatmul.mubr.f32.gmra.mrb[0].mxu0 %v2191
        %v2193 = vpop.f32.mrb[0].mxu0
        %v2194 = vadd.f32 %v2120, %v2193
        %v2195 = vpop.f32.mrb[0].mxu0
        %2196 = vdwg.mxu0
        %2197 = vmatprep.subr.mxu0 0.0
        %v2198 = vand.u32 %v1821, 4294901760
        %2199 = vmatpush1.msra.mxu0 %v2198
        %2200 = vmatprep.subr.mxu0 0.0
        %2201 = vmatpush1.msra.mxu0 0.0
        %2202 = vmatprep.subr.mxu0 0.0
        %2203 = vmatpush1.msra.mxu0 0.0
        %2204 = vmatprep.subr.mxu0 0.0
        %2205 = vmatpush1.msra.mxu0 0.0
        %2206 = vmatprep.subr.mxu0 0.0
        %2207 = vmatpush1.msra.mxu0 0.0
        %2208 = vmatprep.subr.mxu0 0.0
        %2209 = vmatpush1.msra.mxu0 0.0
        %2210 = vmatprep.subr.mxu0 0.0
        %2211 = vmatpush1.msra.mxu0 0.0
        %2212 = vmatprep.subr.mxu0 0.0
        %2213 = vmatpush1.msra.mxu0 0.0
        %2214 = vmatprep.subr.mxu0 0.0
        %2215 = vmatpush1.msra.mxu0 0.0
        %2216 = vmatprep.subr.mxu0 0.0
        %2217 = vmatpush1.msra.mxu0 0.0
        %2218 = vmatprep.subr.mxu0 0.0
        %2219 = vmatpush1.msra.mxu0 0.0
        %2220 = vmatprep.subr.mxu0 0.0
        %2221 = vmatpush1.msra.mxu0 0.0
        %2222 = vmatprep.subr.mxu0 0.0
        %2223 = vmatpush1.msra.mxu0 0.0
        %2224 = vmatprep.subr.mxu0 0.0
        %2225 = vmatpush1.msra.mxu0 0.0
        %2226 = vmatprep.subr.mxu0 0.0
        %2227 = vmatpush1.msra.mxu0 0.0
        %2228 = vmatprep.subr.mxu0 0.0
        %2229 = vmatpush1.msra.mxu0 0.0
        %2230 = vmatprep.subr.mxu0 0.0
        %2231 = vmatpush1.msra.mxu0 0.0
        %2232 = vmatprep.subr.mxu0 0.0
        %2233 = vmatpush1.msra.mxu0 0.0
        %2234 = vmatprep.subr.mxu0 0.0
        %2235 = vmatpush1.msra.mxu0 0.0
        %2236 = vmatprep.subr.mxu0 0.0
        %2237 = vmatpush1.msra.mxu0 0.0
        %2238 = vmatprep.subr.mxu0 0.0
        %2239 = vmatpush1.msra.mxu0 0.0
        %2240 = vmatprep.subr.mxu0 0.0
        %2241 = vmatpush1.msra.mxu0 0.0
        %2242 = vmatprep.subr.mxu0 0.0
        %2243 = vmatpush1.msra.mxu0 0.0
        %2244 = vmatprep.subr.mxu0 0.0
        %2245 = vmatpush1.msra.mxu0 0.0
        %2246 = vmatprep.subr.mxu0 0.0
        %2247 = vmatpush1.msra.mxu0 0.0
        %2248 = vmatprep.subr.mxu0 0.0
        %2249 = vmatpush1.msra.mxu0 0.0
        %2250 = vmatprep.subr.mxu0 0.0
        %2251 = vmatpush1.msra.mxu0 0.0
        %2252 = vmatprep.subr.mxu0 0.0
        %2253 = vmatpush1.msra.mxu0 0.0
        %2254 = vmatprep.subr.mxu0 0.0
        %2255 = vmatpush1.msra.mxu0 0.0
        %2256 = vmatprep.subr.mxu0 0.0
        %2257 = vmatpush1.msra.mxu0 0.0
        %2258 = vmatprep.subr.mxu0 0.0
        %2259 = vmatpush1.msra.mxu0 0.0
        %2260 = vmatprep.subr.mxu0 0.0
        %2261 = vmatpush1.msra.mxu0 0.0
        %2262 = vmatprep.mubr.f32.mxu0 0.0
        %v2263 = vand.u32 %v1818, 4294901760
        %2264 = vmatmul.mubr.f32.gmra.mrb[0].mxu0 %v2263
        %v2265 = vpop.f32.mrb[0].mxu0
        %v2266 = vadd.f32 %v2194, %v2265
        %v2267 = vpop.f32.mrb[0].mxu0
        %2268 = vdwg.mxu0
        %v2269 = vadd.f32 %v408, %v2266
        %2270 = vst [vmem:[%s389] sm:$0xf] %v2269
        %s2271 = sand.u32 %s229, 1
        %s2272 = scalar_lea.sflag [#allocation4], %s2271
        %s2273 = sand.u32 %s229, 1
        %s2274 = smul.addr %s2273, 4
        %s2275 = scalar_lea.vmem [#allocation7], %s2274
        // Predicated region
        $region57: #{tpu_custom_call.1} parent=47 // pred_check
          %p2276 = pneg %p239
        $region58: #{tpu_custom_call.1} parent=47 // pred_check_branch
          %2278 = sbr.rel (%p2276) target = $region60
        $region59: #{tpu_custom_call.1} parent=47 // pred_region
          %s2280 = ssub.s32 64, 64
          %2281 = vsyncadd %s2272, %s2280
          %s2282 = sadd.s32 %s31, %s32
          %s2283 = smul.addr %s2282, 64
          %s2284 = scalar_lea.hbm %s7, %s2283
          %s2286 = sshll.u32 %s2275, 4
          %s2287 = int_to_ptr.vmem [resolvable:$true] %s2286
          %2289 = dma.vmem_to_hbm [thread:$0]  %s2287, 64, %s2284, %s2272
        $region60: #{tpu_custom_call.1} parent=47 // pred_fallthru
          _
      $region48: #{tpu_custom_call.1} parent=5 // pred_fallthru
        _
      %p2290 = scmp.le.s32.totalorder 2, %s22
      // Predicated region
      $region61: #{tpu_custom_call.1} parent=5 // pred_check
        %p2291 = pneg %p2290
      $region62: #{tpu_custom_call.1} parent=5 // pred_check_branch
        %2293 = sbr.rel (%p2291) target = $region64
      $region63: #{tpu_custom_call.1} parent=5 // pred_region
        %s2294 = ssub.s32 %s22, 2
        // Predicated region
        $region65: #{tpu_custom_call.1} parent=63 // pred_check
          %p2295 = pneg %p245
        $region66: #{tpu_custom_call.1} parent=63 // pred_check_branch
          %2297 = sbr.rel (%p2295) target = $region68
        $region67: #{tpu_custom_call.1} parent=63 // pred_region
          %s2298 = sand.u32 %s230, 1
          %s2299 = scalar_lea.sflag [#allocation4], %s2298
          %s2300 = sand.u32 %s230, 1
          %s2301 = smul.addr %s2300, 4
          %s2302 = scalar_lea.vmem [#allocation7], %s2301
          %2303 = dma.done %s2299, 64
        $region68: #{tpu_custom_call.1} parent=63 // pred_fallthru
          _
      $region64: #{tpu_custom_call.1} parent=5 // pred_fallthru
        _
    $region6: #{tpu_custom_call.1} parent=1 // loop_footer
      %s26 = sadd.s32 1, %s22
    $region7: #{tpu_custom_call.1} parent=1 // loop_footer_branch
      %21 = sbr.rel target = $region3
    $region8: #{tpu_custom_call.1} parent=1 // loop_exit
      _
    %2304 = vsyncpa [#allocation3], 1
    %s2305 = scalar_lea.sflag [#allocation3], 1
    %2306 = vsyncpa %s2305, 1
    %2307 = vsyncpa [#allocation6], 1
    %s2308 = scalar_lea.sflag [#allocation6], 1
    %2309 = vsyncpa %s2308, 1
    %2310 = vsyncpa [#allocation4], 1
    %s2311 = scalar_lea.sflag [#allocation4], 1
    %2312 = vsyncpa %s2311, 1

</llo_original>
